<compile_context>
chip_gen: v7x
topology: tpu7x:2x2x1
jax: 0.10.0
libtpu: 0.0.40
codegen_flags: <defaults>
</compile_context>

<pallas_src>
import numpy as np
import jax
import jax.numpy as jnp
from jax.experimental import pallas as pl
from jax.experimental.pallas import tpu as pltpu


# -----------------------------------------------------------------------------
# Static host-side index table for the fused conv1+pool1 -> conv2 im2col.
# Patch-row ordering (chosen so every in-kernel slice is contiguous & aligned):
#   row = phase1*(9*B*16) + t2*(B*16) + b*16 + (q*4 + s)
#     phase1 = rh1*2 + rw1 : pool1 window position (max'ed in kernel)
#     t2     = dh2*3 + dw2 : conv2 tap             (becomes a column block)
#     q      = ph*2  + pw  : pool2 output position (fc1 block index)
#     s      = rh*2  + rw  : pool2 window position (max'ed in kernel)
#   col = t1 = dh1*3 + dw1 : conv1 tap (contracted by the conv1 matmul)
# -----------------------------------------------------------------------------
def _build_patch_index():
    idx = np.zeros((4, 9, 16, 9), dtype=np.int32)
    for rh1 in range(2):
        for rw1 in range(2):
            p1 = rh1 * 2 + rw1
            for dh2 in range(3):
                for dw2 in range(3):
                    t2 = dh2 * 3 + dw2
                    for ph in range(2):
                        for pw in range(2):
                            for rh in range(2):
                                for rw in range(2):
                                    qs = (ph * 2 + pw) * 4 + (rh * 2 + rw)
                                    for dh1 in range(3):
                                        for dw1 in range(3):
                                            t1 = dh1 * 3 + dw1
                                            y = 4 * ph + 2 * rh + 2 * dh2 + rh1 + dh1
                                            x = 4 * pw + 2 * rw + 2 * dw2 + rw1 + dw1
                                            idx[p1, t2, qs, t1] = y * 14 + x
    return idx


_PATCH_IDX = _build_patch_index()          # (4, 9, 16, 9), flat indices into 14x14

# Row offsets of each parameter inside the packed (280, 128) weight slab
# (all offsets are multiples of 8 so in-kernel slices are tile aligned).
_W1, _B1, _W2, _B2 = 0, 16, 24, 88
_F1W, _F1B, _F2W, _F2B, _F3W, _F3B = 96, 152, 160, 248, 256, 272
_SLAB_ROWS = 280


# ------------------------------ fused kernel --------------------------------

def _net_kernel(xp_ref, w_ref, o_ref, p2_ref, h0_ref):
    """Entire Net forward on VMEM-resident data.

    xp_ref : (4*9*B*16, 9)  conv1 im2col patches (row order documented above)
    w_ref  : (280, 128)     packed weight/bias slab
    o_ref  : (B, 9)         logits
    p2_ref : (B*16, 63)     scratch: conv2 im2col
    h0_ref : (B, 56)        scratch: pool2 output in NCHW-flatten order
    """
    f32 = jnp.float32
    B = o_ref.shape[0]
    M2 = B * 16                   # conv2 matmul rows (= conv2 output positions)
    NR1 = 9 * M2                  # conv1 rows per pool1 phase

    # Static slices of the packed weight slab.
    w1 = w_ref[_W1:_W1 + 9, 0:7]
    b1 = w_ref[_B1:_B1 + 1, 0:7]
    w2 = w_ref[_W2:_W2 + 63, 0:14]
    b2 = w_ref[_B2:_B2 + 1, 0:14]
    fc1w = w_ref[_F1W:_F1W + 56, 0:84]
    fc1b = w_ref[_F1B:_F1B + 1, 0:84]
    fc2w = w_ref[_F2W:_F2W + 84, 0:14]
    fc2b = w_ref[_F2B:_F2B + 1, 0:14]
    fc3w = w_ref[_F3W:_F3W + 14, 0:9]
    fc3b = w_ref[_F3B:_F3B + 1, 0:9]

    # ---- conv1 (im2col matmul per pool1 phase) + pool1 + tanh ---------------
    # tanh is hoisted past the max over pool phases (exact; monotone).
    m = None
    for p in range(4):
        zp = jnp.dot(xp_ref[p * NR1:(p + 1) * NR1, :], w1,
                     preferred_element_type=f32)                 # (NR1, 7)
        m = zp if m is None else jnp.maximum(m, zp)
    p1 = jnp.tanh(m + b1)                                        # (NR1, 7)

    # ---- conv2 as ONE matmul: assemble the 9-tap im2col in VMEM scratch -----
    for t in range(9):
        p2_ref[:, t * 7:(t + 1) * 7] = p1[t * M2:(t + 1) * M2, :]
    z2 = jnp.dot(p2_ref[...], w2, preferred_element_type=f32) + b2   # (M2, 14)

    # ---- pool2 + NCHW flatten (folded into the (B, 56) scratch layout) ------
    for b in range(B):
        for q in range(4):                                        # q = ph*2+pw
            g = b * 4 + q
            win = z2[g * 4:(g + 1) * 4, :]                        # 2x2 window
            h0_ref[b:b + 1, q * 14:(q + 1) * 14] = jnp.max(
                win, axis=0, keepdims=True)

    # ---- MLP (ReLU applied after pool2 -- exact, ReLU is monotone) ----------
    h0 = jnp.maximum(h0_ref[...], 0.0)                            # (B, 56)
    h1 = jnp.maximum(jnp.dot(h0, fc1w, preferred_element_type=f32) + fc1b, 0.0)
    h2 = jnp.maximum(jnp.dot(h1, fc2w, preferred_element_type=f32) + fc2b, 0.0)
    out = jnp.dot(h2, fc3w, preferred_element_type=f32) + fc3b
    o_ref[...] = out.astype(o_ref.dtype)


# ------------------------------ host wrappers --------------------------------

def prepare_params(params):
    """One-time re-layout: pack every weight/bias into a single f32 slab."""
    w1 = jnp.transpose(params["conv1_w"][:, 0], (1, 2, 0)).reshape(9, 7)
    w2 = jnp.transpose(params["conv2_w"], (2, 3, 1, 0)).reshape(63, 14)
    # torch fc1 input index = c*4 + q  ->  slab row index q*14 + c
    fc1 = jnp.transpose(params["fc1_w"].reshape(84, 14, 4),
                        (2, 1, 0)).reshape(56, 84)

    slab = jnp.zeros((_SLAB_ROWS, 128), jnp.float32)
    slab = slab.at[_W1:_W1 + 9, 0:7].set(w1)
    slab = slab.at[_B1, 0:7].set(params["conv1_b"])
    slab = slab.at[_W2:_W2 + 63, 0:14].set(w2)
    slab = slab.at[_B2, 0:14].set(params["conv2_b"])
    slab = slab.at[_F1W:_F1W + 56, 0:84].set(fc1)
    slab = slab.at[_F1B, 0:84].set(params["fc1_b"])
    slab = slab.at[_F2W:_F2W + 84, 0:14].set(params["fc2_w"].T)
    slab = slab.at[_F2B, 0:14].set(params["fc2_b"])
    slab = slab.at[_F3W:_F3W + 14, 0:9].set(params["fc3_w"].T)
    slab = slab.at[_F3B, 0:9].set(params["fc3_b"])
    return slab


def net_forward(x_nchw, slab):
    B, C, H, W = x_nchw.shape
    assert C == 1 and H == 14 and W == 14, "Net expects (B, 1, 14, 14) inputs"

    # Host-side im2col: one tiny XLA gather over the 14x14 images.
    xf = x_nchw.reshape(B, H * W)
    idx = jnp.asarray(_PATCH_IDX.reshape(-1))
    g = jnp.take(xf, idx, axis=1).reshape(B, 4, 9, 16, 9)
    xp = jnp.transpose(g, (1, 2, 0, 3, 4)).reshape(4 * 9 * B * 16, 9)

    return pl.pallas_call(
        _net_kernel,
        out_shape=jax.ShapeDtypeStruct((B, 9), jnp.float32),
        in_specs=[pl.BlockSpec(memory_space=pltpu.MemorySpace.VMEM),
                  pl.BlockSpec(memory_space=pltpu.MemorySpace.VMEM)],
        out_specs=pl.BlockSpec(memory_space=pltpu.MemorySpace.VMEM),
        scratch_shapes=[pltpu.VMEM((B * 16, 63), jnp.float32),
                        pltpu.VMEM((B, 56), jnp.float32)],
    )(xp, slab)


# ------------------------------ reference & init ----------------------------

def reference_forward(x, params):
    """Pure-JAX (XLA) reference matching the PyTorch module."""
    hi = jax.lax.Precision.HIGHEST
    y = jax.lax.conv_general_dilated(
        x, params["conv1_w"], window_strides=(1, 1), padding="VALID",
        dimension_numbers=("NCHW", "OIHW", "NCHW"), precision=hi)
    y = jnp.tanh(y + params["conv1_b"][None, :, None, None])
    y = jax.lax.reduce_window(y, -jnp.inf, jax.lax.max,
                              (1, 1, 2, 2), (1, 1, 2, 2), "VALID")
    y = jax.lax.conv_general_dilated(
        y, params["conv2_w"], window_strides=(1, 1), padding="VALID",
        dimension_numbers=("NCHW", "OIHW", "NCHW"), precision=hi)
    y = jnp.maximum(y + params["conv2_b"][None, :, None, None], 0.0)
    y = jax.lax.reduce_window(y, -jnp.inf, jax.lax.max,
                              (1, 1, 2, 2), (1, 1, 2, 2), "VALID")
    f = y.reshape(y.shape[0], 14 * 2 * 2)
    h = jnp.maximum(jnp.dot(f, params["fc1_w"].T, precision=hi)
                    + params["fc1_b"], 0.0)
    h = jnp.maximum(jnp.dot(h, params["fc2_w"].T, precision=hi)
                    + params["fc2_b"], 0.0)
    return jnp.dot(h, params["fc3_w"].T, precision=hi) + params["fc3_b"]


def init_params(key):
    def uniform(k, shape, fan_in):
        bound = 1.0 / (fan_in ** 0.5)                 # PyTorch-style default
        return jax.random.uniform(k, shape, jnp.float32, -bound, bound)

    ks = jax.random.split(key, 10)
    return {
        "conv1_w": uniform(ks[0], (7, 1, 3, 3), 1 * 9),
        "conv1_b": uniform(ks[1], (7,), 1 * 9),
        "conv2_w": uniform(ks[2], (14, 7, 3, 3), 7 * 9),
        "conv2_b": uniform(ks[3], (14,), 7 * 9),
        "fc1_w":   uniform(ks[4], (84, 56), 56),
        "fc1_b":   uniform(ks[5], (84,), 56),
        "fc2_w":   uniform(ks[6], (14, 84), 84),
        "fc2_b":   uniform(ks[7], (14,), 84),
        "fc3_w":   uniform(ks[8], (9, 14), 14),
        "fc3_b":   uniform(ks[9], (9,), 14),
    }


if __name__ == "__main__":
    key = jax.random.PRNGKey(0)
    pkey, xkey = jax.random.split(key)
    params = init_params(pkey)
    slab = prepare_params(params)          # one-time weight packing

    # batch=2, 1 channel, 14x14 (the only spatial size consistent with fc1)
    x = jax.random.normal(xkey, (2, 1, 14, 14), jnp.float32)

    fwd = jax.jit(net_forward)
    out = jax.block_until_ready(fwd(x, slab))
    assert out.shape == (2, 9) and out.dtype == jnp.float32

    ref = jax.block_until_ready(reference_forward(x, params))
    max_diff = float(jnp.max(jnp.abs(out - ref)))
    assert jnp.allclose(out, ref, atol=2e-2, rtol=2e-2), f"max|diff|={max_diff}"

    print("KERNEL_OK")
</pallas_src>

<mosaic_0001>
module attributes {stable_mosaic.version = 11 : i64} {
  func.func @_net_kernel(%arg0: memref<1152x9xf32, #tpu.memory_space<vmem>>, %arg1: memref<280x128xf32, #tpu.memory_space<vmem>>, %arg2: memref<2x9xf32, #tpu.memory_space<vmem>>, %arg3: memref<32x63xf32, #tpu.memory_space<vmem>>, %arg4: memref<2x56xf32, #tpu.memory_space<vmem>>) attributes {dimension_semantics = [], scalar_prefetch = 0 : i64, scratch_operands = 2 : i64, tpu.core_type = #tpu.core_type<tc>} {
    %c0 = arith.constant 0 : index
    %c0_0 = arith.constant 0 : index
    %0 = vector.load %arg1[%c0, %c0_0] : memref<280x128xf32, #tpu.memory_space<vmem>>, vector<9x7xf32>
    %c16 = arith.constant 16 : index
    %c0_1 = arith.constant 0 : index
    %1 = vector.load %arg1[%c16, %c0_1] : memref<280x128xf32, #tpu.memory_space<vmem>>, vector<1x7xf32>
    %c24 = arith.constant 24 : index
    %c0_2 = arith.constant 0 : index
    %2 = vector.load %arg1[%c24, %c0_2] : memref<280x128xf32, #tpu.memory_space<vmem>>, vector<63x14xf32>
    %c88 = arith.constant 88 : index
    %c0_3 = arith.constant 0 : index
    %3 = vector.load %arg1[%c88, %c0_3] : memref<280x128xf32, #tpu.memory_space<vmem>>, vector<1x14xf32>
    %c96 = arith.constant 96 : index
    %c0_4 = arith.constant 0 : index
    %4 = vector.load %arg1[%c96, %c0_4] : memref<280x128xf32, #tpu.memory_space<vmem>>, vector<56x84xf32>
    %c152 = arith.constant 152 : index
    %c0_5 = arith.constant 0 : index
    %5 = vector.load %arg1[%c152, %c0_5] : memref<280x128xf32, #tpu.memory_space<vmem>>, vector<1x84xf32>
    %c160 = arith.constant 160 : index
    %c0_6 = arith.constant 0 : index
    %6 = vector.load %arg1[%c160, %c0_6] : memref<280x128xf32, #tpu.memory_space<vmem>>, vector<84x14xf32>
    %c248 = arith.constant 248 : index
    %c0_7 = arith.constant 0 : index
    %7 = vector.load %arg1[%c248, %c0_7] : memref<280x128xf32, #tpu.memory_space<vmem>>, vector<1x14xf32>
    %c256 = arith.constant 256 : index
    %c0_8 = arith.constant 0 : index
    %8 = vector.load %arg1[%c256, %c0_8] : memref<280x128xf32, #tpu.memory_space<vmem>>, vector<14x9xf32>
    %c272 = arith.constant 272 : index
    %c0_9 = arith.constant 0 : index
    %9 = vector.load %arg1[%c272, %c0_9] : memref<280x128xf32, #tpu.memory_space<vmem>>, vector<1x9xf32>
    %c0_10 = arith.constant 0 : index
    %c0_11 = arith.constant 0 : index
    %10 = vector.load %arg0[%c0_10, %c0_11] : memref<1152x9xf32, #tpu.memory_space<vmem>>, vector<288x9xf32>
    %cst = arith.constant dense<0.000000e+00> : vector<288x7xf32>
    %11 = tpu.matmul %10, %0, %cst {dimension_numbers = #tpu.dot_dimension_numbers<[1], [0], [0], [1], [0, 0, 1, 1], [], []>} : vector<288x9xf32>, vector<9x7xf32>, vector<288x7xf32> -> vector<288x7xf32>
    %c288 = arith.constant 288 : index
    %c0_12 = arith.constant 0 : index
    %12 = vector.load %arg0[%c288, %c0_12] : memref<1152x9xf32, #tpu.memory_space<vmem>>, vector<288x9xf32>
    %cst_13 = arith.constant dense<0.000000e+00> : vector<288x7xf32>
    %13 = tpu.matmul %12, %0, %cst_13 {dimension_numbers = #tpu.dot_dimension_numbers<[1], [0], [0], [1], [0, 0, 1, 1], [], []>} : vector<288x9xf32>, vector<9x7xf32>, vector<288x7xf32> -> vector<288x7xf32>
    %14 = arith.maximumf %11, %13 : vector<288x7xf32>
    %c576 = arith.constant 576 : index
    %c0_14 = arith.constant 0 : index
    %15 = vector.load %arg0[%c576, %c0_14] : memref<1152x9xf32, #tpu.memory_space<vmem>>, vector<288x9xf32>
    %cst_15 = arith.constant dense<0.000000e+00> : vector<288x7xf32>
    %16 = tpu.matmul %15, %0, %cst_15 {dimension_numbers = #tpu.dot_dimension_numbers<[1], [0], [0], [1], [0, 0, 1, 1], [], []>} : vector<288x9xf32>, vector<9x7xf32>, vector<288x7xf32> -> vector<288x7xf32>
    %17 = arith.maximumf %14, %16 : vector<288x7xf32>
    %c864 = arith.constant 864 : index
    %c0_16 = arith.constant 0 : index
    %18 = vector.load %arg0[%c864, %c0_16] : memref<1152x9xf32, #tpu.memory_space<vmem>>, vector<288x9xf32>
    %cst_17 = arith.constant dense<0.000000e+00> : vector<288x7xf32>
    %19 = tpu.matmul %18, %0, %cst_17 {dimension_numbers = #tpu.dot_dimension_numbers<[1], [0], [0], [1], [0, 0, 1, 1], [], []>} : vector<288x9xf32>, vector<9x7xf32>, vector<288x7xf32> -> vector<288x7xf32>
    %20 = arith.maximumf %17, %19 : vector<288x7xf32>
    %21 = vector.broadcast %1 : vector<1x7xf32> to vector<288x7xf32>
    %22 = arith.addf %20, %21 : vector<288x7xf32>
    %23 = math.tanh %22 : vector<288x7xf32>
    %24 = vector.extract_strided_slice %23 {offsets = [0, 0], sizes = [32, 7], strides = [1, 1]} : vector<288x7xf32> to vector<32x7xf32>
    %c0_18 = arith.constant 0 : index
    %c0_19 = arith.constant 0 : index
    %25 = vector.load %arg3[%c0_18, %c0_19] : memref<32x63xf32, #tpu.memory_space<vmem>>, vector<32x7xf32>
    tpu.vector_store %arg3[%c0_18, %c0_19], %24 {strides = array<i32>} : memref<32x63xf32, #tpu.memory_space<vmem>>, vector<32x7xf32>,
    %26 = vector.extract_strided_slice %23 {offsets = [32, 0], sizes = [32, 7], strides = [1, 1]} : vector<288x7xf32> to vector<32x7xf32>
    %c0_20 = arith.constant 0 : index
    %c7 = arith.constant 7 : index
    %27 = vector.load %arg3[%c0_20, %c7] : memref<32x63xf32, #tpu.memory_space<vmem>>, vector<32x7xf32>
    tpu.vector_store %arg3[%c0_20, %c7], %26 {strides = array<i32>} : memref<32x63xf32, #tpu.memory_space<vmem>>, vector<32x7xf32>,
    %28 = vector.extract_strided_slice %23 {offsets = [64, 0], sizes = [32, 7], strides = [1, 1]} : vector<288x7xf32> to vector<32x7xf32>
    %c0_21 = arith.constant 0 : index
    %c14 = arith.constant 14 : index
    %29 = vector.load %arg3[%c0_21, %c14] : memref<32x63xf32, #tpu.memory_space<vmem>>, vector<32x7xf32>
    tpu.vector_store %arg3[%c0_21, %c14], %28 {strides = array<i32>} : memref<32x63xf32, #tpu.memory_space<vmem>>, vector<32x7xf32>,
    %30 = vector.extract_strided_slice %23 {offsets = [96, 0], sizes = [32, 7], strides = [1, 1]} : vector<288x7xf32> to vector<32x7xf32>
    %c0_22 = arith.constant 0 : index
    %c21 = arith.constant 21 : index
    %31 = vector.load %arg3[%c0_22, %c21] : memref<32x63xf32, #tpu.memory_space<vmem>>, vector<32x7xf32>
    tpu.vector_store %arg3[%c0_22, %c21], %30 {strides = array<i32>} : memref<32x63xf32, #tpu.memory_space<vmem>>, vector<32x7xf32>,
    %32 = vector.extract_strided_slice %23 {offsets = [128, 0], sizes = [32, 7], strides = [1, 1]} : vector<288x7xf32> to vector<32x7xf32>
    %c0_23 = arith.constant 0 : index
    %c28 = arith.constant 28 : index
    %33 = vector.load %arg3[%c0_23, %c28] : memref<32x63xf32, #tpu.memory_space<vmem>>, vector<32x7xf32>
    tpu.vector_store %arg3[%c0_23, %c28], %32 {strides = array<i32>} : memref<32x63xf32, #tpu.memory_space<vmem>>, vector<32x7xf32>,
    %34 = vector.extract_strided_slice %23 {offsets = [160, 0], sizes = [32, 7], strides = [1, 1]} : vector<288x7xf32> to vector<32x7xf32>
    %c0_24 = arith.constant 0 : index
    %c35 = arith.constant 35 : index
    %35 = vector.load %arg3[%c0_24, %c35] : memref<32x63xf32, #tpu.memory_space<vmem>>, vector<32x7xf32>
    tpu.vector_store %arg3[%c0_24, %c35], %34 {strides = array<i32>} : memref<32x63xf32, #tpu.memory_space<vmem>>, vector<32x7xf32>,
    %36 = vector.extract_strided_slice %23 {offsets = [192, 0], sizes = [32, 7], strides = [1, 1]} : vector<288x7xf32> to vector<32x7xf32>
    %c0_25 = arith.constant 0 : index
    %c42 = arith.constant 42 : index
    %37 = vector.load %arg3[%c0_25, %c42] : memref<32x63xf32, #tpu.memory_space<vmem>>, vector<32x7xf32>
    tpu.vector_store %arg3[%c0_25, %c42], %36 {strides = array<i32>} : memref<32x63xf32, #tpu.memory_space<vmem>>, vector<32x7xf32>,
    %38 = vector.extract_strided_slice %23 {offsets = [224, 0], sizes = [32, 7], strides = [1, 1]} : vector<288x7xf32> to vector<32x7xf32>
    %c0_26 = arith.constant 0 : index
    %c49 = arith.constant 49 : index
    %39 = vector.load %arg3[%c0_26, %c49] : memref<32x63xf32, #tpu.memory_space<vmem>>, vector<32x7xf32>
    tpu.vector_store %arg3[%c0_26, %c49], %38 {strides = array<i32>} : memref<32x63xf32, #tpu.memory_space<vmem>>, vector<32x7xf32>,
    %40 = vector.extract_strided_slice %23 {offsets = [256, 0], sizes = [32, 7], strides = [1, 1]} : vector<288x7xf32> to vector<32x7xf32>
    %c0_27 = arith.constant 0 : index
    %c56 = arith.constant 56 : index
    %41 = vector.load %arg3[%c0_27, %c56] : memref<32x63xf32, #tpu.memory_space<vmem>>, vector<32x7xf32>
    tpu.vector_store %arg3[%c0_27, %c56], %40 {strides = array<i32>} : memref<32x63xf32, #tpu.memory_space<vmem>>, vector<32x7xf32>,
    %c0_28 = arith.constant 0 : index
    %c0_29 = arith.constant 0 : index
    %42 = vector.load %arg3[%c0_28, %c0_29] : memref<32x63xf32, #tpu.memory_space<vmem>>, vector<32x63xf32>
    %cst_30 = arith.constant dense<0.000000e+00> : vector<32x14xf32>
    %43 = tpu.matmul %42, %2, %cst_30 {dimension_numbers = #tpu.dot_dimension_numbers<[1], [0], [0], [1], [0, 0, 1, 1], [], []>} : vector<32x63xf32>, vector<63x14xf32>, vector<32x14xf32> -> vector<32x14xf32>
    %44 = vector.broadcast %3 : vector<1x14xf32> to vector<32x14xf32>
    %45 = arith.addf %43, %44 : vector<32x14xf32>
    %46 = vector.extract_strided_slice %45 {offsets = [0, 0], sizes = [4, 14], strides = [1, 1]} : vector<32x14xf32> to vector<4x14xf32>
    %cst_31 = arith.constant dense<0xFF800000> : vector<14xf32>
    %47 = vector.multi_reduction <maximumf>, %46, %cst_31 [0] : vector<4x14xf32> to vector<14xf32>
    %48 = vector.shape_cast %47 : vector<14xf32> to vector<1x14xf32>
    %c0_32 = arith.constant 0 : index
    %c0_33 = arith.constant 0 : index
    %49 = vector.load %arg4[%c0_32, %c0_33] : memref<2x56xf32, #tpu.memory_space<vmem>>, vector<1x14xf32>
    tpu.vector_store %arg4[%c0_32, %c0_33], %48 {strides = array<i32>} : memref<2x56xf32, #tpu.memory_space<vmem>>, vector<1x14xf32>,
    %50 = vector.extract_strided_slice %45 {offsets = [4, 0], sizes = [4, 14], strides = [1, 1]} : vector<32x14xf32> to vector<4x14xf32>
    %cst_34 = arith.constant dense<0xFF800000> : vector<14xf32>
    %51 = vector.multi_reduction <maximumf>, %50, %cst_34 [0] : vector<4x14xf32> to vector<14xf32>
    %52 = vector.shape_cast %51 : vector<14xf32> to vector<1x14xf32>
    %c0_35 = arith.constant 0 : index
    %c14_36 = arith.constant 14 : index
    %53 = vector.load %arg4[%c0_35, %c14_36] : memref<2x56xf32, #tpu.memory_space<vmem>>, vector<1x14xf32>
    tpu.vector_store %arg4[%c0_35, %c14_36], %52 {strides = array<i32>} : memref<2x56xf32, #tpu.memory_space<vmem>>, vector<1x14xf32>,
    %54 = vector.extract_strided_slice %45 {offsets = [8, 0], sizes = [4, 14], strides = [1, 1]} : vector<32x14xf32> to vector<4x14xf32>
    %cst_37 = arith.constant dense<0xFF800000> : vector<14xf32>
    %55 = vector.multi_reduction <maximumf>, %54, %cst_37 [0] : vector<4x14xf32> to vector<14xf32>
    %56 = vector.shape_cast %55 : vector<14xf32> to vector<1x14xf32>
    %c0_38 = arith.constant 0 : index
    %c28_39 = arith.constant 28 : index
    %57 = vector.load %arg4[%c0_38, %c28_39] : memref<2x56xf32, #tpu.memory_space<vmem>>, vector<1x14xf32>
    tpu.vector_store %arg4[%c0_38, %c28_39], %56 {strides = array<i32>} : memref<2x56xf32, #tpu.memory_space<vmem>>, vector<1x14xf32>,
    %58 = vector.extract_strided_slice %45 {offsets = [12, 0], sizes = [4, 14], strides = [1, 1]} : vector<32x14xf32> to vector<4x14xf32>
    %cst_40 = arith.constant dense<0xFF800000> : vector<14xf32>
    %59 = vector.multi_reduction <maximumf>, %58, %cst_40 [0] : vector<4x14xf32> to vector<14xf32>
    %60 = vector.shape_cast %59 : vector<14xf32> to vector<1x14xf32>
    %c0_41 = arith.constant 0 : index
    %c42_42 = arith.constant 42 : index
    %61 = vector.load %arg4[%c0_41, %c42_42] : memref<2x56xf32, #tpu.memory_space<vmem>>, vector<1x14xf32>
    tpu.vector_store %arg4[%c0_41, %c42_42], %60 {strides = array<i32>} : memref<2x56xf32, #tpu.memory_space<vmem>>, vector<1x14xf32>,
    %62 = vector.extract_strided_slice %45 {offsets = [16, 0], sizes = [4, 14], strides = [1, 1]} : vector<32x14xf32> to vector<4x14xf32>
    %cst_43 = arith.constant dense<0xFF800000> : vector<14xf32>
    %63 = vector.multi_reduction <maximumf>, %62, %cst_43 [0] : vector<4x14xf32> to vector<14xf32>
    %64 = vector.shape_cast %63 : vector<14xf32> to vector<1x14xf32>
    %c1 = arith.constant 1 : index
    %c0_44 = arith.constant 0 : index
    %65 = vector.load %arg4[%c1, %c0_44] : memref<2x56xf32, #tpu.memory_space<vmem>>, vector<1x14xf32>
    tpu.vector_store %arg4[%c1, %c0_44], %64 {strides = array<i32>} : memref<2x56xf32, #tpu.memory_space<vmem>>, vector<1x14xf32>,
    %66 = vector.extract_strided_slice %45 {offsets = [20, 0], sizes = [4, 14], strides = [1, 1]} : vector<32x14xf32> to vector<4x14xf32>
    %cst_45 = arith.constant dense<0xFF800000> : vector<14xf32>
    %67 = vector.multi_reduction <maximumf>, %66, %cst_45 [0] : vector<4x14xf32> to vector<14xf32>
    %68 = vector.shape_cast %67 : vector<14xf32> to vector<1x14xf32>
    %c1_46 = arith.constant 1 : index
    %c14_47 = arith.constant 14 : index
    %69 = vector.load %arg4[%c1_46, %c14_47] : memref<2x56xf32, #tpu.memory_space<vmem>>, vector<1x14xf32>
    tpu.vector_store %arg4[%c1_46, %c14_47], %68 {strides = array<i32>} : memref<2x56xf32, #tpu.memory_space<vmem>>, vector<1x14xf32>,
    %70 = vector.extract_strided_slice %45 {offsets = [24, 0], sizes = [4, 14], strides = [1, 1]} : vector<32x14xf32> to vector<4x14xf32>
    %cst_48 = arith.constant dense<0xFF800000> : vector<14xf32>
    %71 = vector.multi_reduction <maximumf>, %70, %cst_48 [0] : vector<4x14xf32> to vector<14xf32>
    %72 = vector.shape_cast %71 : vector<14xf32> to vector<1x14xf32>
    %c1_49 = arith.constant 1 : index
    %c28_50 = arith.constant 28 : index
    %73 = vector.load %arg4[%c1_49, %c28_50] : memref<2x56xf32, #tpu.memory_space<vmem>>, vector<1x14xf32>
    tpu.vector_store %arg4[%c1_49, %c28_50], %72 {strides = array<i32>} : memref<2x56xf32, #tpu.memory_space<vmem>>, vector<1x14xf32>,
    %74 = vector.extract_strided_slice %45 {offsets = [28, 0], sizes = [4, 14], strides = [1, 1]} : vector<32x14xf32> to vector<4x14xf32>
    %cst_51 = arith.constant dense<0xFF800000> : vector<14xf32>
    %75 = vector.multi_reduction <maximumf>, %74, %cst_51 [0] : vector<4x14xf32> to vector<14xf32>
    %76 = vector.shape_cast %75 : vector<14xf32> to vector<1x14xf32>
    %c1_52 = arith.constant 1 : index
    %c42_53 = arith.constant 42 : index
    %77 = vector.load %arg4[%c1_52, %c42_53] : memref<2x56xf32, #tpu.memory_space<vmem>>, vector<1x14xf32>
    tpu.vector_store %arg4[%c1_52, %c42_53], %76 {strides = array<i32>} : memref<2x56xf32, #tpu.memory_space<vmem>>, vector<1x14xf32>,
    %c0_54 = arith.constant 0 : index
    %c0_55 = arith.constant 0 : index
    %78 = vector.load %arg4[%c0_54, %c0_55] : memref<2x56xf32, #tpu.memory_space<vmem>>, vector<2x56xf32>
    %cst_56 = arith.constant 0.000000e+00 : f32
    %79 = vector.broadcast %cst_56 : f32 to vector<2x56xf32>
    %80 = arith.maximumf %78, %79 : vector<2x56xf32>
    %cst_57 = arith.constant dense<0.000000e+00> : vector<2x84xf32>
    %81 = tpu.matmul %80, %4, %cst_57 {dimension_numbers = #tpu.dot_dimension_numbers<[1], [0], [0], [1], [0, 0, 1, 1], [], []>} : vector<2x56xf32>, vector<56x84xf32>, vector<2x84xf32> -> vector<2x84xf32>
    %82 = vector.broadcast %5 : vector<1x84xf32> to vector<2x84xf32>
    %83 = arith.addf %81, %82 : vector<2x84xf32>
    %cst_58 = arith.constant 0.000000e+00 : f32
    %84 = vector.broadcast %cst_58 : f32 to vector<2x84xf32>
    %85 = arith.maximumf %83, %84 : vector<2x84xf32>
    %cst_59 = arith.constant dense<0.000000e+00> : vector<2x14xf32>
    %86 = tpu.matmul %85, %6, %cst_59 {dimension_numbers = #tpu.dot_dimension_numbers<[1], [0], [0], [1], [0, 0, 1, 1], [], []>} : vector<2x84xf32>, vector<84x14xf32>, vector<2x14xf32> -> vector<2x14xf32>
    %87 = vector.broadcast %7 : vector<1x14xf32> to vector<2x14xf32>
    %88 = arith.addf %86, %87 : vector<2x14xf32>
    %cst_60 = arith.constant 0.000000e+00 : f32
    %89 = vector.broadcast %cst_60 : f32 to vector<2x14xf32>
    %90 = arith.maximumf %88, %89 : vector<2x14xf32>
    %cst_61 = arith.constant dense<0.000000e+00> : vector<2x9xf32>
    %91 = tpu.matmul %90, %8, %cst_61 {dimension_numbers = #tpu.dot_dimension_numbers<[1], [0], [0], [1], [0, 0, 1, 1], [], []>} : vector<2x14xf32>, vector<14x9xf32>, vector<2x9xf32> -> vector<2x9xf32>
    %92 = vector.broadcast %9 : vector<1x9xf32> to vector<2x9xf32>
    %93 = arith.addf %91, %92 : vector<2x9xf32>
    %c0_62 = arith.constant 0 : index
    %c0_63 = arith.constant 0 : index
    %94 = vector.load %arg2[%c0_62, %c0_63] : memref<2x9xf32, #tpu.memory_space<vmem>>, vector<2x9xf32>
    tpu.vector_store %arg2[%c0_62, %c0_63], %93 {strides = array<i32>} : memref<2x9xf32, #tpu.memory_space<vmem>>, vector<2x9xf32>,
    return
  }
}

</mosaic_0001>

<llo_original>
// kernel: net_forward.1
$region0: #{net_forward.1}
  #allocation0 [shape = 'u32[]', space=smem, size = 0x4, offset = 0x4, fixed_abs, tag = 'smem constant byte address 0x4 - core index']
  #allocation1 [shape = 'u32[144,128]{1,0:T(1,128)}', space=vmem, size = 0x12000, scoped, tag = 'internal scratch']
  #allocation2 [shape = 'f32[32,63]{1,0:T(8,128)}', space=vmem, size = 0x4000, scoped, tag = 'scratch operand']
  #allocation3 [shape = 'f32[2,56]{1,0:T(2,128)}', space=vmem, size = 0x400, scoped, tag = 'scratch operand']
  %s0 = inlined_call_operand.vmem [shape: f32[1152,9], index: 0, kind: input, shape index: {}]
  %s1 = inlined_call_operand.vmem [shape: f32[280,128], index: 1, kind: input, shape index: {}]
  %s2 = inlined_call_operand.hbm [shape: f32[2,9], index: 2, kind: output, shape index: {}]
  %s3 = sld [smem:[#allocation0]]
  $region18: #{net_forward.1} parent=0
    _
  %s5 = ssub.s32 1, %s3
  %s6 = scalar_select 0, %s5, %s3
  $region1: #{net_forward.1} parent=0
    #allocation4 [shape = 'u8[1024]{0}', space=vmem, size = 0x400, scoped, tag = 'output window, operand 0, single buffered']
    #allocation5 [shape = 's32[1]{0}', space=sflag, size = 0x4, scoped, tag = 'scoped memory for net_forward.1']
    %7 = vsyncpa [#allocation5], 0
    // Predicated region
    $region2: #{net_forward.1} parent=1 // pred_check
      _
    $region3: #{net_forward.1} parent=1 // pred_check_branch
      %9 = sbr.rel (0) target = $region5
    $region4: #{net_forward.1} parent=1 // pred_region
      _
    $region5: #{net_forward.1} parent=1 // pred_fallthru
      _
    // Predicated region
    $region6: #{net_forward.1} parent=1 // pred_check
      _
    $region7: #{net_forward.1} parent=1 // pred_check_branch
      %11 = sbr.rel (0) target = $region9
    $region8: #{net_forward.1} parent=1 // pred_region
      _
    $region9: #{net_forward.1} parent=1 // pred_fallthru
      _
    %v12 = vld [vmem:[%s1] sm:$0xff]
    %v13 = vld [vmem:[%s1 + $0x8] sm:$0x1]
    %v14 = vld [vmem:[%s1 + $0x10] sm:$0x1]
    %v15 = vld [vmem:[%s1 + $0x18] sm:$0xff]
    %v16 = vld [vmem:[%s1 + $0x20] sm:$0xff]
    %v17 = vld [vmem:[%s1 + $0x28] sm:$0xff]
    %v18 = vld [vmem:[%s1 + $0x30] sm:$0xff]
    %v19 = vld [vmem:[%s1 + $0x38] sm:$0xff]
    %v20 = vld [vmem:[%s1 + $0x40] sm:$0xff]
    %v21 = vld [vmem:[%s1 + $0x48] sm:$0xff]
    %v22 = vld [vmem:[%s1 + $0x50] sm:$0x7f]
    %v23 = vld [vmem:[%s1 + $0x58] sm:$0x1]
    %v24 = vld [vmem:[%s1 + $0x60] sm:$0xff]
    %v25 = vld [vmem:[%s1 + $0x68] sm:$0xff]
    %v26 = vld [vmem:[%s1 + $0x70] sm:$0xff]
    %v27 = vld [vmem:[%s1 + $0x78] sm:$0xff]
    %v28 = vld [vmem:[%s1 + $0x80] sm:$0xff]
    %v29 = vld [vmem:[%s1 + $0x88] sm:$0xff]
    %v30 = vld [vmem:[%s1 + $0x90] sm:$0xff]
    %v31 = vld [vmem:[%s1 + $0x98] sm:$0x1]
    %v32 = vld [vmem:[%s1 + $0xa0] sm:$0xff]
    %v33 = vld [vmem:[%s1 + $0xa8] sm:$0xff]
    %v34 = vld [vmem:[%s1 + $0xb0] sm:$0xff]
    %v35 = vld [vmem:[%s1 + $0xb8] sm:$0xff]
    %v36 = vld [vmem:[%s1 + $0xc0] sm:$0xff]
    %v37 = vld [vmem:[%s1 + $0xc8] sm:$0xff]
    %v38 = vld [vmem:[%s1 + $0xd0] sm:$0xff]
    %v39 = vld [vmem:[%s1 + $0xd8] sm:$0xff]
    %v40 = vld [vmem:[%s1 + $0xe0] sm:$0xff]
    %v41 = vld [vmem:[%s1 + $0xe8] sm:$0xff]
    %v42 = vld [vmem:[%s1 + $0xf0] sm:$0xf]
    %v43 = vld [vmem:[%s1 + $0xf8] sm:$0x1]
    %v44 = vld [vmem:[%s1 + $0x100] sm:$0xff]
    %v45 = vld [vmem:[%s1 + $0x108] sm:$0x3f]
    %v46 = vld [vmem:[%s1 + $0x110] sm:$0x1]
    %v47 = vld [vmem:[%s0] sm:$0xff]
    %v48 = vld [vmem:[%s0 + $0x8] sm:$0xff]
    %v49 = vld [vmem:[%s0 + $0x10] sm:$0xff]
    %v50 = vld [vmem:[%s0 + $0x18] sm:$0xff]
    %v51 = vld [vmem:[%s0 + $0x20] sm:$0xff]
    %v52 = vld [vmem:[%s0 + $0x28] sm:$0xff]
    %v53 = vld [vmem:[%s0 + $0x30] sm:$0xff]
    %v54 = vld [vmem:[%s0 + $0x38] sm:$0xff]
    %v55 = vld [vmem:[%s0 + $0x40] sm:$0xff]
    %v56 = vld [vmem:[%s0 + $0x48] sm:$0xff]
    %v57 = vld [vmem:[%s0 + $0x50] sm:$0xff]
    %v58 = vld [vmem:[%s0 + $0x58] sm:$0xff]
    %v59 = vld [vmem:[%s0 + $0x60] sm:$0xff]
    %v60 = vld [vmem:[%s0 + $0x68] sm:$0xff]
    %v61 = vld [vmem:[%s0 + $0x70] sm:$0xff]
    %v62 = vld [vmem:[%s0 + $0x78] sm:$0xff]
    %v63 = vld [vmem:[%s0 + $0x80] sm:$0xff]
    %v64 = vld [vmem:[%s0 + $0x88] sm:$0xff]
    %v65 = vld [vmem:[%s0 + $0x90] sm:$0xff]
    %v66 = vld [vmem:[%s0 + $0x98] sm:$0xff]
    %v67 = vld [vmem:[%s0 + $0xa0] sm:$0xff]
    %v68 = vld [vmem:[%s0 + $0xa8] sm:$0xff]
    %v69 = vld [vmem:[%s0 + $0xb0] sm:$0xff]
    %v70 = vld [vmem:[%s0 + $0xb8] sm:$0xff]
    %v71 = vld [vmem:[%s0 + $0xc0] sm:$0xff]
    %v72 = vld [vmem:[%s0 + $0xc8] sm:$0xff]
    %v73 = vld [vmem:[%s0 + $0xd0] sm:$0xff]
    %v74 = vld [vmem:[%s0 + $0xd8] sm:$0xff]
    %v75 = vld [vmem:[%s0 + $0xe0] sm:$0xff]
    %v76 = vld [vmem:[%s0 + $0xe8] sm:$0xff]
    %v77 = vld [vmem:[%s0 + $0xf0] sm:$0xff]
    %v78 = vld [vmem:[%s0 + $0xf8] sm:$0xff]
    %v79 = vld [vmem:[%s0 + $0x100] sm:$0xff]
    %v80 = vld [vmem:[%s0 + $0x108] sm:$0xff]
    %v81 = vld [vmem:[%s0 + $0x110] sm:$0xff]
    %v82 = vld [vmem:[%s0 + $0x118] sm:$0xff]
    %vm83 = vcmask 72704
    %v85 = vsel %vm83, %v47, 0
    %v88 = vsel %vm83, %v48, 0
    %v91 = vsel %vm83, %v49, 0
    %v94 = vsel %vm83, %v50, 0
    %v97 = vsel %vm83, %v51, 0
    %v100 = vsel %vm83, %v52, 0
    %v103 = vsel %vm83, %v53, 0
    %v106 = vsel %vm83, %v54, 0
    %v109 = vsel %vm83, %v55, 0
    %v112 = vsel %vm83, %v56, 0
    %v115 = vsel %vm83, %v57, 0
    %v118 = vsel %vm83, %v58, 0
    %v121 = vsel %vm83, %v59, 0
    %v124 = vsel %vm83, %v60, 0
    %v127 = vsel %vm83, %v61, 0
    %v130 = vsel %vm83, %v62, 0
    %v133 = vsel %vm83, %v63, 0
    %v136 = vsel %vm83, %v64, 0
    %v139 = vsel %vm83, %v65, 0
    %v142 = vsel %vm83, %v66, 0
    %v145 = vsel %vm83, %v67, 0
    %v148 = vsel %vm83, %v68, 0
    %v151 = vsel %vm83, %v69, 0
    %v154 = vsel %vm83, %v70, 0
    %v157 = vsel %vm83, %v71, 0
    %v160 = vsel %vm83, %v72, 0
    %v163 = vsel %vm83, %v73, 0
    %v166 = vsel %vm83, %v74, 0
    %v169 = vsel %vm83, %v75, 0
    %v172 = vsel %vm83, %v76, 0
    %v175 = vsel %vm83, %v77, 0
    %v178 = vsel %vm83, %v78, 0
    %v181 = vsel %vm83, %v79, 0
    %v184 = vsel %vm83, %v80, 0
    %v187 = vsel %vm83, %v81, 0
    %v190 = vsel %vm83, %v82, 0
    %vm192 = vcmask 1040384
    %v194 = vsel %vm192, %v13, 0
    %196 = vmatprep.subr.mxu0 0.0
    %197 = vmatpush1.msra.mxu0 %v12
    %198 = vmatprep.subr.mxu0 0.0
    %199 = vmatpush1.msra.mxu0 %v194
    %200 = vmatprep.subr.mxu0 0.0
    %201 = vmatpush1.msra.mxu0 0.0
    %202 = vmatprep.subr.mxu0 0.0
    %203 = vmatpush1.msra.mxu0 0.0
    %204 = vmatprep.subr.mxu0 0.0
    %205 = vmatpush1.msra.mxu0 0.0
    %206 = vmatprep.subr.mxu0 0.0
    %207 = vmatpush1.msra.mxu0 0.0
    %208 = vmatprep.subr.mxu0 0.0
    %209 = vmatpush1.msra.mxu0 0.0
    %210 = vmatprep.subr.mxu0 0.0
    %211 = vmatpush1.msra.mxu0 0.0
    %212 = vmatprep.subr.mxu0 0.0
    %213 = vmatpush1.msra.mxu0 0.0
    %214 = vmatprep.subr.mxu0 0.0
    %215 = vmatpush1.msra.mxu0 0.0
    %216 = vmatprep.subr.mxu0 0.0
    %217 = vmatpush1.msra.mxu0 0.0
    %218 = vmatprep.subr.mxu0 0.0
    %219 = vmatpush1.msra.mxu0 0.0
    %220 = vmatprep.subr.mxu0 0.0
    %221 = vmatpush1.msra.mxu0 0.0
    %222 = vmatprep.subr.mxu0 0.0
    %223 = vmatpush1.msra.mxu0 0.0
    %224 = vmatprep.subr.mxu0 0.0
    %225 = vmatpush1.msra.mxu0 0.0
    %226 = vmatprep.subr.mxu0 0.0
    %227 = vmatpush1.msra.mxu0 0.0
    %228 = vmatprep.subr.mxu0 0.0
    %229 = vmatpush1.msra.mxu0 0.0
    %230 = vmatprep.subr.mxu0 0.0
    %231 = vmatpush1.msra.mxu0 0.0
    %232 = vmatprep.subr.mxu0 0.0
    %233 = vmatpush1.msra.mxu0 0.0
    %234 = vmatprep.subr.mxu0 0.0
    %235 = vmatpush1.msra.mxu0 0.0
    %236 = vmatprep.subr.mxu0 0.0
    %237 = vmatpush1.msra.mxu0 0.0
    %238 = vmatprep.subr.mxu0 0.0
    %239 = vmatpush1.msra.mxu0 0.0
    %240 = vmatprep.subr.mxu0 0.0
    %241 = vmatpush1.msra.mxu0 0.0
    %242 = vmatprep.subr.mxu0 0.0
    %243 = vmatpush1.msra.mxu0 0.0
    %244 = vmatprep.subr.mxu0 0.0
    %245 = vmatpush1.msra.mxu0 0.0
    %246 = vmatprep.subr.mxu0 0.0
    %247 = vmatpush1.msra.mxu0 0.0
    %248 = vmatprep.subr.mxu0 0.0
    %249 = vmatpush1.msra.mxu0 0.0
    %250 = vmatprep.subr.mxu0 0.0
    %251 = vmatpush1.msra.mxu0 0.0
    %252 = vmatprep.subr.mxu0 0.0
    %253 = vmatpush1.msra.mxu0 0.0
    %254 = vmatprep.subr.mxu0 0.0
    %255 = vmatpush1.msra.mxu0 0.0
    %256 = vmatprep.subr.mxu0 0.0
    %257 = vmatpush1.msra.mxu0 0.0
    %258 = vmatprep.subr.mxu0 0.0
    %259 = vmatpush1.msra.mxu0 0.0
    %260 = vmatprep.mubr.f32.mxu0 0.0
    %261 = vmatmul.mubr.f32.gmra.mrb[0].mxu0 %v85
    %v262 = vpop.f32.mrb[0].mxu0
    %v263 = vadd.f32 0.0, %v262
    %v264 = vpop.f32.mrb[0].mxu0
    %265 = vmatprep.mubr.f32.mxu0 0.0
    %266 = vmatmul.mubr.f32.gmra.mrb[0].mxu0 %v88
    %v267 = vpop.f32.mrb[0].mxu0
    %v268 = vadd.f32 0.0, %v267
    %v269 = vpop.f32.mrb[0].mxu0
    %270 = vmatprep.mubr.f32.mxu0 0.0
    %271 = vmatmul.mubr.f32.gmra.mrb[0].mxu0 %v91
    %v272 = vpop.f32.mrb[0].mxu0
    %v273 = vadd.f32 0.0, %v272
    %v274 = vpop.f32.mrb[0].mxu0
    %275 = vmatprep.mubr.f32.mxu0 0.0
    %276 = vmatmul.mubr.f32.gmra.mrb[0].mxu0 %v94
    %v277 = vpop.f32.mrb[0].mxu0
    %v278 = vadd.f32 0.0, %v277
    %v279 = vpop.f32.mrb[0].mxu0
    %280 = vmatprep.mubr.f32.mxu0 0.0
    %281 = vmatmul.mubr.f32.gmra.mrb[0].mxu0 %v97
    %v282 = vpop.f32.mrb[0].mxu0
    %v283 = vadd.f32 0.0, %v282
    %v284 = vpop.f32.mrb[0].mxu0
    %285 = vmatprep.mubr.f32.mxu0 0.0
    %286 = vmatmul.mubr.f32.gmra.mrb[0].mxu0 %v100
    %v287 = vpop.f32.mrb[0].mxu0
    %v288 = vadd.f32 0.0, %v287
    %v289 = vpop.f32.mrb[0].mxu0
    %290 = vmatprep.mubr.f32.mxu0 0.0
    %291 = vmatmul.mubr.f32.gmra.mrb[0].mxu0 %v103
    %v292 = vpop.f32.mrb[0].mxu0
    %v293 = vadd.f32 0.0, %v292
    %v294 = vpop.f32.mrb[0].mxu0
    %295 = vmatprep.mubr.f32.mxu0 0.0
    %296 = vmatmul.mubr.f32.gmra.mrb[0].mxu0 %v106
    %v297 = vpop.f32.mrb[0].mxu0
    %v298 = vadd.f32 0.0, %v297
    %v299 = vpop.f32.mrb[0].mxu0
    %300 = vmatprep.mubr.f32.mxu0 0.0
    %301 = vmatmul.mubr.f32.gmra.mrb[0].mxu0 %v109
    %v302 = vpop.f32.mrb[0].mxu0
    %v303 = vadd.f32 0.0, %v302
    %v304 = vpop.f32.mrb[0].mxu0
    %305 = vmatprep.mubr.f32.mxu0 0.0
    %306 = vmatmul.mubr.f32.gmra.mrb[0].mxu0 %v112
    %v307 = vpop.f32.mrb[0].mxu0
    %v308 = vadd.f32 0.0, %v307
    %v309 = vpop.f32.mrb[0].mxu0
    %310 = vmatprep.mubr.f32.mxu0 0.0
    %311 = vmatmul.mubr.f32.gmra.mrb[0].mxu0 %v115
    %v312 = vpop.f32.mrb[0].mxu0
    %v313 = vadd.f32 0.0, %v312
    %v314 = vpop.f32.mrb[0].mxu0
    %315 = vmatprep.mubr.f32.mxu0 0.0
    %316 = vmatmul.mubr.f32.gmra.mrb[0].mxu0 %v118
    %v317 = vpop.f32.mrb[0].mxu0
    %v318 = vadd.f32 0.0, %v317
    %v319 = vpop.f32.mrb[0].mxu0
    %320 = vmatprep.mubr.f32.mxu0 0.0
    %321 = vmatmul.mubr.f32.gmra.mrb[0].mxu0 %v121
    %v322 = vpop.f32.mrb[0].mxu0
    %v323 = vadd.f32 0.0, %v322
    %v324 = vpop.f32.mrb[0].mxu0
    %325 = vmatprep.mubr.f32.mxu0 0.0
    %326 = vmatmul.mubr.f32.gmra.mrb[0].mxu0 %v124
    %v327 = vpop.f32.mrb[0].mxu0
    %v328 = vadd.f32 0.0, %v327
    %v329 = vpop.f32.mrb[0].mxu0
    %330 = vmatprep.mubr.f32.mxu0 0.0
    %331 = vmatmul.mubr.f32.gmra.mrb[0].mxu0 %v127
    %v332 = vpop.f32.mrb[0].mxu0
    %v333 = vadd.f32 0.0, %v332
    %v334 = vpop.f32.mrb[0].mxu0
    %335 = vmatprep.mubr.f32.mxu0 0.0
    %336 = vmatmul.mubr.f32.gmra.mrb[0].mxu0 %v130
    %v337 = vpop.f32.mrb[0].mxu0
    %v338 = vadd.f32 0.0, %v337
    %v339 = vpop.f32.mrb[0].mxu0
    %340 = vmatprep.mubr.f32.mxu0 0.0
    %341 = vmatmul.mubr.f32.gmra.mrb[0].mxu0 %v133
    %v342 = vpop.f32.mrb[0].mxu0
    %v343 = vadd.f32 0.0, %v342
    %v344 = vpop.f32.mrb[0].mxu0
    %345 = vmatprep.mubr.f32.mxu0 0.0
    %346 = vmatmul.mubr.f32.gmra.mrb[0].mxu0 %v136
    %v347 = vpop.f32.mrb[0].mxu0
    %v348 = vadd.f32 0.0, %v347
    %v349 = vpop.f32.mrb[0].mxu0
    %350 = vmatprep.mubr.f32.mxu0 0.0
    %351 = vmatmul.mubr.f32.gmra.mrb[0].mxu0 %v139
    %v352 = vpop.f32.mrb[0].mxu0
    %v353 = vadd.f32 0.0, %v352
    %v354 = vpop.f32.mrb[0].mxu0
    %355 = vmatprep.mubr.f32.mxu0 0.0
    %356 = vmatmul.mubr.f32.gmra.mrb[0].mxu0 %v142
    %v357 = vpop.f32.mrb[0].mxu0
    %v358 = vadd.f32 0.0, %v357
    %v359 = vpop.f32.mrb[0].mxu0
    %360 = vmatprep.mubr.f32.mxu0 0.0
    %361 = vmatmul.mubr.f32.gmra.mrb[0].mxu0 %v145
    %v362 = vpop.f32.mrb[0].mxu0
    %v363 = vadd.f32 0.0, %v362
    %v364 = vpop.f32.mrb[0].mxu0
    %365 = vmatprep.mubr.f32.mxu0 0.0
    %366 = vmatmul.mubr.f32.gmra.mrb[0].mxu0 %v148
    %v367 = vpop.f32.mrb[0].mxu0
    %v368 = vadd.f32 0.0, %v367
    %v369 = vpop.f32.mrb[0].mxu0
    %370 = vmatprep.mubr.f32.mxu0 0.0
    %371 = vmatmul.mubr.f32.gmra.mrb[0].mxu0 %v151
    %v372 = vpop.f32.mrb[0].mxu0
    %v373 = vadd.f32 0.0, %v372
    %v374 = vpop.f32.mrb[0].mxu0
    %375 = vmatprep.mubr.f32.mxu0 0.0
    %376 = vmatmul.mubr.f32.gmra.mrb[0].mxu0 %v154
    %v377 = vpop.f32.mrb[0].mxu0
    %v378 = vadd.f32 0.0, %v377
    %v379 = vpop.f32.mrb[0].mxu0
    %380 = vmatprep.mubr.f32.mxu0 0.0
    %381 = vmatmul.mubr.f32.gmra.mrb[0].mxu0 %v157
    %v382 = vpop.f32.mrb[0].mxu0
    %v383 = vadd.f32 0.0, %v382
    %v384 = vpop.f32.mrb[0].mxu0
    %385 = vmatprep.mubr.f32.mxu0 0.0
    %386 = vmatmul.mubr.f32.gmra.mrb[0].mxu0 %v160
    %v387 = vpop.f32.mrb[0].mxu0
    %v388 = vadd.f32 0.0, %v387
    %v389 = vpop.f32.mrb[0].mxu0
    %390 = vmatprep.mubr.f32.mxu0 0.0
    %391 = vmatmul.mubr.f32.gmra.mrb[0].mxu0 %v163
    %v392 = vpop.f32.mrb[0].mxu0
    %v393 = vadd.f32 0.0, %v392
    %v394 = vpop.f32.mrb[0].mxu0
    %395 = vmatprep.mubr.f32.mxu0 0.0
    %396 = vmatmul.mubr.f32.gmra.mrb[0].mxu0 %v166
    %v397 = vpop.f32.mrb[0].mxu0
    %v398 = vadd.f32 0.0, %v397
    %v399 = vpop.f32.mrb[0].mxu0
    %400 = vmatprep.mubr.f32.mxu0 0.0
    %401 = vmatmul.mubr.f32.gmra.mrb[0].mxu0 %v169
    %v402 = vpop.f32.mrb[0].mxu0
    %v403 = vadd.f32 0.0, %v402
    %v404 = vpop.f32.mrb[0].mxu0
    %405 = vmatprep.mubr.f32.mxu0 0.0
    %406 = vmatmul.mubr.f32.gmra.mrb[0].mxu0 %v172
    %v407 = vpop.f32.mrb[0].mxu0
    %v408 = vadd.f32 0.0, %v407
    %v409 = vpop.f32.mrb[0].mxu0
    %410 = vmatprep.mubr.f32.mxu0 0.0
    %411 = vmatmul.mubr.f32.gmra.mrb[0].mxu0 %v175
    %v412 = vpop.f32.mrb[0].mxu0
    %v413 = vadd.f32 0.0, %v412
    %v414 = vpop.f32.mrb[0].mxu0
    %415 = vmatprep.mubr.f32.mxu0 0.0
    %416 = vmatmul.mubr.f32.gmra.mrb[0].mxu0 %v178
    %v417 = vpop.f32.mrb[0].mxu0
    %v418 = vadd.f32 0.0, %v417
    %v419 = vpop.f32.mrb[0].mxu0
    %420 = vmatprep.mubr.f32.mxu0 0.0
    %421 = vmatmul.mubr.f32.gmra.mrb[0].mxu0 %v181
    %v422 = vpop.f32.mrb[0].mxu0
    %v423 = vadd.f32 0.0, %v422
    %v424 = vpop.f32.mrb[0].mxu0
    %425 = vmatprep.mubr.f32.mxu0 0.0
    %426 = vmatmul.mubr.f32.gmra.mrb[0].mxu0 %v184
    %v427 = vpop.f32.mrb[0].mxu0
    %v428 = vadd.f32 0.0, %v427
    %v429 = vpop.f32.mrb[0].mxu0
    %430 = vmatprep.mubr.f32.mxu0 0.0
    %431 = vmatmul.mubr.f32.gmra.mrb[0].mxu0 %v187
    %v432 = vpop.f32.mrb[0].mxu0
    %v433 = vadd.f32 0.0, %v432
    %v434 = vpop.f32.mrb[0].mxu0
    %435 = vmatprep.mubr.f32.mxu0 0.0
    %436 = vmatmul.mubr.f32.gmra.mrb[0].mxu0 %v190
    %v437 = vpop.f32.mrb[0].mxu0
    %v438 = vadd.f32 0.0, %v437
    %v439 = vpop.f32.mrb[0].mxu0
    %440 = vdwg.mxu0
    %v441 = vld [vmem:[%s0 + $0x120] sm:$0xff]
    %v442 = vld [vmem:[%s0 + $0x128] sm:$0xff]
    %v443 = vld [vmem:[%s0 + $0x130] sm:$0xff]
    %v444 = vld [vmem:[%s0 + $0x138] sm:$0xff]
    %v445 = vld [vmem:[%s0 + $0x140] sm:$0xff]
    %v446 = vld [vmem:[%s0 + $0x148] sm:$0xff]
    %v447 = vld [vmem:[%s0 + $0x150] sm:$0xff]
    %v448 = vld [vmem:[%s0 + $0x158] sm:$0xff]
    %v449 = vld [vmem:[%s0 + $0x160] sm:$0xff]
    %v450 = vld [vmem:[%s0 + $0x168] sm:$0xff]
    %v451 = vld [vmem:[%s0 + $0x170] sm:$0xff]
    %v452 = vld [vmem:[%s0 + $0x178] sm:$0xff]
    %v453 = vld [vmem:[%s0 + $0x180] sm:$0xff]
    %v454 = vld [vmem:[%s0 + $0x188] sm:$0xff]
    %v455 = vld [vmem:[%s0 + $0x190] sm:$0xff]
    %v456 = vld [vmem:[%s0 + $0x198] sm:$0xff]
    %v457 = vld [vmem:[%s0 + $0x1a0] sm:$0xff]
    %v458 = vld [vmem:[%s0 + $0x1a8] sm:$0xff]
    %v459 = vld [vmem:[%s0 + $0x1b0] sm:$0xff]
    %v460 = vld [vmem:[%s0 + $0x1b8] sm:$0xff]
    %v461 = vld [vmem:[%s0 + $0x1c0] sm:$0xff]
    %v462 = vld [vmem:[%s0 + $0x1c8] sm:$0xff]
    %v463 = vld [vmem:[%s0 + $0x1d0] sm:$0xff]
    %v464 = vld [vmem:[%s0 + $0x1d8] sm:$0xff]
    %v465 = vld [vmem:[%s0 + $0x1e0] sm:$0xff]
    %v466 = vld [vmem:[%s0 + $0x1e8] sm:$0xff]
    %v467 = vld [vmem:[%s0 + $0x1f0] sm:$0xff]
    %v468 = vld [vmem:[%s0 + $0x1f8] sm:$0xff]
    %v469 = vld [vmem:[%s0 + $0x200] sm:$0xff]
    %v470 = vld [vmem:[%s0 + $0x208] sm:$0xff]
    %v471 = vld [vmem:[%s0 + $0x210] sm:$0xff]
    %v472 = vld [vmem:[%s0 + $0x218] sm:$0xff]
    %v473 = vld [vmem:[%s0 + $0x220] sm:$0xff]
    %v474 = vld [vmem:[%s0 + $0x228] sm:$0xff]
    %v475 = vld [vmem:[%s0 + $0x230] sm:$0xff]
    %v476 = vld [vmem:[%s0 + $0x238] sm:$0xff]
    %v478 = vsel %vm83, %v441, 0
    %v481 = vsel %vm83, %v442, 0
    %v484 = vsel %vm83, %v443, 0
    %v487 = vsel %vm83, %v444, 0
    %v490 = vsel %vm83, %v445, 0
    %v493 = vsel %vm83, %v446, 0
    %v496 = vsel %vm83, %v447, 0
    %v499 = vsel %vm83, %v448, 0
    %v502 = vsel %vm83, %v449, 0
    %v505 = vsel %vm83, %v450, 0
    %v508 = vsel %vm83, %v451, 0
    %v511 = vsel %vm83, %v452, 0
    %v514 = vsel %vm83, %v453, 0
    %v517 = vsel %vm83, %v454, 0
    %v520 = vsel %vm83, %v455, 0
    %v523 = vsel %vm83, %v456, 0
    %v526 = vsel %vm83, %v457, 0
    %v529 = vsel %vm83, %v458, 0
    %v532 = vsel %vm83, %v459, 0
    %v535 = vsel %vm83, %v460, 0
    %v538 = vsel %vm83, %v461, 0
    %v541 = vsel %vm83, %v462, 0
    %v544 = vsel %vm83, %v463, 0
    %v547 = vsel %vm83, %v464, 0
    %v550 = vsel %vm83, %v465, 0
    %v553 = vsel %vm83, %v466, 0
    %v556 = vsel %vm83, %v467, 0
    %v559 = vsel %vm83, %v468, 0
    %v562 = vsel %vm83, %v469, 0
    %v565 = vsel %vm83, %v470, 0
    %v568 = vsel %vm83, %v471, 0
    %v571 = vsel %vm83, %v472, 0
    %v574 = vsel %vm83, %v473, 0
    %v577 = vsel %vm83, %v474, 0
    %v580 = vsel %vm83, %v475, 0
    %v583 = vsel %vm83, %v476, 0
    %585 = vmatprep.subr.mxu0 0.0
    %586 = vmatpush1.msra.mxu0 %v12
    %587 = vmatprep.subr.mxu0 0.0
    %588 = vmatpush1.msra.mxu0 %v194
    %589 = vmatprep.subr.mxu0 0.0
    %590 = vmatpush1.msra.mxu0 0.0
    %591 = vmatprep.subr.mxu0 0.0
    %592 = vmatpush1.msra.mxu0 0.0
    %593 = vmatprep.subr.mxu0 0.0
    %594 = vmatpush1.msra.mxu0 0.0
    %595 = vmatprep.subr.mxu0 0.0
    %596 = vmatpush1.msra.mxu0 0.0
    %597 = vmatprep.subr.mxu0 0.0
    %598 = vmatpush1.msra.mxu0 0.0
    %599 = vmatprep.subr.mxu0 0.0
    %600 = vmatpush1.msra.mxu0 0.0
    %601 = vmatprep.subr.mxu0 0.0
    %602 = vmatpush1.msra.mxu0 0.0
    %603 = vmatprep.subr.mxu0 0.0
    %604 = vmatpush1.msra.mxu0 0.0
    %605 = vmatprep.subr.mxu0 0.0
    %606 = vmatpush1.msra.mxu0 0.0
    %607 = vmatprep.subr.mxu0 0.0
    %608 = vmatpush1.msra.mxu0 0.0
    %609 = vmatprep.subr.mxu0 0.0
    %610 = vmatpush1.msra.mxu0 0.0
    %611 = vmatprep.subr.mxu0 0.0
    %612 = vmatpush1.msra.mxu0 0.0
    %613 = vmatprep.subr.mxu0 0.0
    %614 = vmatpush1.msra.mxu0 0.0
    %615 = vmatprep.subr.mxu0 0.0
    %616 = vmatpush1.msra.mxu0 0.0
    %617 = vmatprep.subr.mxu0 0.0
    %618 = vmatpush1.msra.mxu0 0.0
    %619 = vmatprep.subr.mxu0 0.0
    %620 = vmatpush1.msra.mxu0 0.0
    %621 = vmatprep.subr.mxu0 0.0
    %622 = vmatpush1.msra.mxu0 0.0
    %623 = vmatprep.subr.mxu0 0.0
    %624 = vmatpush1.msra.mxu0 0.0
    %625 = vmatprep.subr.mxu0 0.0
    %626 = vmatpush1.msra.mxu0 0.0
    %627 = vmatprep.subr.mxu0 0.0
    %628 = vmatpush1.msra.mxu0 0.0
    %629 = vmatprep.subr.mxu0 0.0
    %630 = vmatpush1.msra.mxu0 0.0
    %631 = vmatprep.subr.mxu0 0.0
    %632 = vmatpush1.msra.mxu0 0.0
    %633 = vmatprep.subr.mxu0 0.0
    %634 = vmatpush1.msra.mxu0 0.0
    %635 = vmatprep.subr.mxu0 0.0
    %636 = vmatpush1.msra.mxu0 0.0
    %637 = vmatprep.subr.mxu0 0.0
    %638 = vmatpush1.msra.mxu0 0.0
    %639 = vmatprep.subr.mxu0 0.0
    %640 = vmatpush1.msra.mxu0 0.0
    %641 = vmatprep.subr.mxu0 0.0
    %642 = vmatpush1.msra.mxu0 0.0
    %643 = vmatprep.subr.mxu0 0.0
    %644 = vmatpush1.msra.mxu0 0.0
    %645 = vmatprep.subr.mxu0 0.0
    %646 = vmatpush1.msra.mxu0 0.0
    %647 = vmatprep.subr.mxu0 0.0
    %648 = vmatpush1.msra.mxu0 0.0
    %649 = vmatprep.mubr.f32.mxu0 0.0
    %650 = vmatmul.mubr.f32.gmra.mrb[0].mxu0 %v478
    %v651 = vpop.f32.mrb[0].mxu0
    %v652 = vadd.f32 0.0, %v651
    %v653 = vpop.f32.mrb[0].mxu0
    %654 = vmatprep.mubr.f32.mxu0 0.0
    %655 = vmatmul.mubr.f32.gmra.mrb[0].mxu0 %v481
    %v656 = vpop.f32.mrb[0].mxu0
    %v657 = vadd.f32 0.0, %v656
    %v658 = vpop.f32.mrb[0].mxu0
    %659 = vmatprep.mubr.f32.mxu0 0.0
    %660 = vmatmul.mubr.f32.gmra.mrb[0].mxu0 %v484
    %v661 = vpop.f32.mrb[0].mxu0
    %v662 = vadd.f32 0.0, %v661
    %v663 = vpop.f32.mrb[0].mxu0
    %664 = vmatprep.mubr.f32.mxu0 0.0
    %665 = vmatmul.mubr.f32.gmra.mrb[0].mxu0 %v487
    %v666 = vpop.f32.mrb[0].mxu0
    %v667 = vadd.f32 0.0, %v666
    %v668 = vpop.f32.mrb[0].mxu0
    %669 = vmatprep.mubr.f32.mxu0 0.0
    %670 = vmatmul.mubr.f32.gmra.mrb[0].mxu0 %v490
    %v671 = vpop.f32.mrb[0].mxu0
    %v672 = vadd.f32 0.0, %v671
    %v673 = vpop.f32.mrb[0].mxu0
    %674 = vmatprep.mubr.f32.mxu0 0.0
    %675 = vmatmul.mubr.f32.gmra.mrb[0].mxu0 %v493
    %v676 = vpop.f32.mrb[0].mxu0
    %v677 = vadd.f32 0.0, %v676
    %v678 = vpop.f32.mrb[0].mxu0
    %679 = vmatprep.mubr.f32.mxu0 0.0
    %680 = vmatmul.mubr.f32.gmra.mrb[0].mxu0 %v496
    %v681 = vpop.f32.mrb[0].mxu0
    %v682 = vadd.f32 0.0, %v681
    %v683 = vpop.f32.mrb[0].mxu0
    %684 = vmatprep.mubr.f32.mxu0 0.0
    %685 = vmatmul.mubr.f32.gmra.mrb[0].mxu0 %v499
    %v686 = vpop.f32.mrb[0].mxu0
    %v687 = vadd.f32 0.0, %v686
    %v688 = vpop.f32.mrb[0].mxu0
    %689 = vmatprep.mubr.f32.mxu0 0.0
    %690 = vmatmul.mubr.f32.gmra.mrb[0].mxu0 %v502
    %v691 = vpop.f32.mrb[0].mxu0
    %v692 = vadd.f32 0.0, %v691
    %v693 = vpop.f32.mrb[0].mxu0
    %694 = vmatprep.mubr.f32.mxu0 0.0
    %695 = vmatmul.mubr.f32.gmra.mrb[0].mxu0 %v505
    %v696 = vpop.f32.mrb[0].mxu0
    %v697 = vadd.f32 0.0, %v696
    %v698 = vpop.f32.mrb[0].mxu0
    %699 = vmatprep.mubr.f32.mxu0 0.0
    %700 = vmatmul.mubr.f32.gmra.mrb[0].mxu0 %v508
    %v701 = vpop.f32.mrb[0].mxu0
    %v702 = vadd.f32 0.0, %v701
    %v703 = vpop.f32.mrb[0].mxu0
    %704 = vmatprep.mubr.f32.mxu0 0.0
    %705 = vmatmul.mubr.f32.gmra.mrb[0].mxu0 %v511
    %v706 = vpop.f32.mrb[0].mxu0
    %v707 = vadd.f32 0.0, %v706
    %v708 = vpop.f32.mrb[0].mxu0
    %709 = vmatprep.mubr.f32.mxu0 0.0
    %710 = vmatmul.mubr.f32.gmra.mrb[0].mxu0 %v514
    %v711 = vpop.f32.mrb[0].mxu0
    %v712 = vadd.f32 0.0, %v711
    %v713 = vpop.f32.mrb[0].mxu0
    %714 = vmatprep.mubr.f32.mxu0 0.0
    %715 = vmatmul.mubr.f32.gmra.mrb[0].mxu0 %v517
    %v716 = vpop.f32.mrb[0].mxu0
    %v717 = vadd.f32 0.0, %v716
    %v718 = vpop.f32.mrb[0].mxu0
    %719 = vmatprep.mubr.f32.mxu0 0.0
    %720 = vmatmul.mubr.f32.gmra.mrb[0].mxu0 %v520
    %v721 = vpop.f32.mrb[0].mxu0
    %v722 = vadd.f32 0.0, %v721
    %v723 = vpop.f32.mrb[0].mxu0
    %724 = vmatprep.mubr.f32.mxu0 0.0
    %725 = vmatmul.mubr.f32.gmra.mrb[0].mxu0 %v523
    %v726 = vpop.f32.mrb[0].mxu0
    %v727 = vadd.f32 0.0, %v726
    %v728 = vpop.f32.mrb[0].mxu0
    %729 = vmatprep.mubr.f32.mxu0 0.0
    %730 = vmatmul.mubr.f32.gmra.mrb[0].mxu0 %v526
    %v731 = vpop.f32.mrb[0].mxu0
    %v732 = vadd.f32 0.0, %v731
    %v733 = vpop.f32.mrb[0].mxu0
    %734 = vmatprep.mubr.f32.mxu0 0.0
    %735 = vmatmul.mubr.f32.gmra.mrb[0].mxu0 %v529
    %v736 = vpop.f32.mrb[0].mxu0
    %v737 = vadd.f32 0.0, %v736
    %v738 = vpop.f32.mrb[0].mxu0
    %739 = vmatprep.mubr.f32.mxu0 0.0
    %740 = vmatmul.mubr.f32.gmra.mrb[0].mxu0 %v532
    %v741 = vpop.f32.mrb[0].mxu0
    %v742 = vadd.f32 0.0, %v741
    %v743 = vpop.f32.mrb[0].mxu0
    %744 = vmatprep.mubr.f32.mxu0 0.0
    %745 = vmatmul.mubr.f32.gmra.mrb[0].mxu0 %v535
    %v746 = vpop.f32.mrb[0].mxu0
    %v747 = vadd.f32 0.0, %v746
    %v748 = vpop.f32.mrb[0].mxu0
    %749 = vmatprep.mubr.f32.mxu0 0.0
    %750 = vmatmul.mubr.f32.gmra.mrb[0].mxu0 %v538
    %v751 = vpop.f32.mrb[0].mxu0
    %v752 = vadd.f32 0.0, %v751
    %v753 = vpop.f32.mrb[0].mxu0
    %754 = vmatprep.mubr.f32.mxu0 0.0
    %755 = vmatmul.mubr.f32.gmra.mrb[0].mxu0 %v541
    %v756 = vpop.f32.mrb[0].mxu0
    %v757 = vadd.f32 0.0, %v756
    %v758 = vpop.f32.mrb[0].mxu0
    %759 = vmatprep.mubr.f32.mxu0 0.0
    %760 = vmatmul.mubr.f32.gmra.mrb[0].mxu0 %v544
    %v761 = vpop.f32.mrb[0].mxu0
    %v762 = vadd.f32 0.0, %v761
    %v763 = vpop.f32.mrb[0].mxu0
    %764 = vmatprep.mubr.f32.mxu0 0.0
    %765 = vmatmul.mubr.f32.gmra.mrb[0].mxu0 %v547
    %v766 = vpop.f32.mrb[0].mxu0
    %v767 = vadd.f32 0.0, %v766
    %v768 = vpop.f32.mrb[0].mxu0
    %769 = vmatprep.mubr.f32.mxu0 0.0
    %770 = vmatmul.mubr.f32.gmra.mrb[0].mxu0 %v550
    %v771 = vpop.f32.mrb[0].mxu0
    %v772 = vadd.f32 0.0, %v771
    %v773 = vpop.f32.mrb[0].mxu0
    %774 = vmatprep.mubr.f32.mxu0 0.0
    %775 = vmatmul.mubr.f32.gmra.mrb[0].mxu0 %v553
    %v776 = vpop.f32.mrb[0].mxu0
    %v777 = vadd.f32 0.0, %v776
    %v778 = vpop.f32.mrb[0].mxu0
    %779 = vmatprep.mubr.f32.mxu0 0.0
    %780 = vmatmul.mubr.f32.gmra.mrb[0].mxu0 %v556
    %v781 = vpop.f32.mrb[0].mxu0
    %v782 = vadd.f32 0.0, %v781
    %v783 = vpop.f32.mrb[0].mxu0
    %784 = vmatprep.mubr.f32.mxu0 0.0
    %785 = vmatmul.mubr.f32.gmra.mrb[0].mxu0 %v559
    %v786 = vpop.f32.mrb[0].mxu0
    %v787 = vadd.f32 0.0, %v786
    %v788 = vpop.f32.mrb[0].mxu0
    %789 = vmatprep.mubr.f32.mxu0 0.0
    %790 = vmatmul.mubr.f32.gmra.mrb[0].mxu0 %v562
    %v791 = vpop.f32.mrb[0].mxu0
    %v792 = vadd.f32 0.0, %v791
    %v793 = vpop.f32.mrb[0].mxu0
    %794 = vmatprep.mubr.f32.mxu0 0.0
    %795 = vmatmul.mubr.f32.gmra.mrb[0].mxu0 %v565
    %v796 = vpop.f32.mrb[0].mxu0
    %v797 = vadd.f32 0.0, %v796
    %v798 = vpop.f32.mrb[0].mxu0
    %799 = vmatprep.mubr.f32.mxu0 0.0
    %800 = vmatmul.mubr.f32.gmra.mrb[0].mxu0 %v568
    %v801 = vpop.f32.mrb[0].mxu0
    %v802 = vadd.f32 0.0, %v801
    %v803 = vpop.f32.mrb[0].mxu0
    %804 = vmatprep.mubr.f32.mxu0 0.0
    %805 = vmatmul.mubr.f32.gmra.mrb[0].mxu0 %v571
    %v806 = vpop.f32.mrb[0].mxu0
    %v807 = vadd.f32 0.0, %v806
    %v808 = vpop.f32.mrb[0].mxu0
    %809 = vmatprep.mubr.f32.mxu0 0.0
    %810 = vmatmul.mubr.f32.gmra.mrb[0].mxu0 %v574
    %v811 = vpop.f32.mrb[0].mxu0
    %v812 = vadd.f32 0.0, %v811
    %v813 = vpop.f32.mrb[0].mxu0
    %814 = vmatprep.mubr.f32.mxu0 0.0
    %815 = vmatmul.mubr.f32.gmra.mrb[0].mxu0 %v577
    %v816 = vpop.f32.mrb[0].mxu0
    %v817 = vadd.f32 0.0, %v816
    %v818 = vpop.f32.mrb[0].mxu0
    %819 = vmatprep.mubr.f32.mxu0 0.0
    %820 = vmatmul.mubr.f32.gmra.mrb[0].mxu0 %v580
    %v821 = vpop.f32.mrb[0].mxu0
    %v822 = vadd.f32 0.0, %v821
    %v823 = vpop.f32.mrb[0].mxu0
    %824 = vmatprep.mubr.f32.mxu0 0.0
    %825 = vmatmul.mubr.f32.gmra.mrb[0].mxu0 %v583
    %v826 = vpop.f32.mrb[0].mxu0
    %v827 = vadd.f32 0.0, %v826
    %v828 = vpop.f32.mrb[0].mxu0
    %829 = vdwg.mxu0
    %v830 = vmax.f32 %v263, %v652
    %v831 = vmax.f32 %v268, %v657
    %v832 = vmax.f32 %v273, %v662
    %v833 = vmax.f32 %v278, %v667
    %v834 = vmax.f32 %v283, %v672
    %v835 = vmax.f32 %v288, %v677
    %v836 = vmax.f32 %v293, %v682
    %v837 = vmax.f32 %v298, %v687
    %v838 = vmax.f32 %v303, %v692
    %v839 = vmax.f32 %v308, %v697
    %v840 = vmax.f32 %v313, %v702
    %v841 = vmax.f32 %v318, %v707
    %v842 = vmax.f32 %v323, %v712
    %v843 = vmax.f32 %v328, %v717
    %v844 = vmax.f32 %v333, %v722
    %v845 = vmax.f32 %v338, %v727
    %v846 = vmax.f32 %v343, %v732
    %v847 = vmax.f32 %v348, %v737
    %v848 = vmax.f32 %v353, %v742
    %v849 = vmax.f32 %v358, %v747
    %v850 = vmax.f32 %v363, %v752
    %v851 = vmax.f32 %v368, %v757
    %v852 = vmax.f32 %v373, %v762
    %v853 = vmax.f32 %v378, %v767
    %v854 = vmax.f32 %v383, %v772
    %v855 = vmax.f32 %v388, %v777
    %v856 = vmax.f32 %v393, %v782
    %v857 = vmax.f32 %v398, %v787
    %v858 = vmax.f32 %v403, %v792
    %v859 = vmax.f32 %v408, %v797
    %v860 = vmax.f32 %v413, %v802
    %v861 = vmax.f32 %v418, %v807
    %v862 = vmax.f32 %v423, %v812
    %v863 = vmax.f32 %v428, %v817
    %v864 = vmax.f32 %v433, %v822
    %v865 = vmax.f32 %v438, %v827
    %v866 = vld [vmem:[%s0 + $0x240] sm:$0xff]
    %v867 = vld [vmem:[%s0 + $0x248] sm:$0xff]
    %v868 = vld [vmem:[%s0 + $0x250] sm:$0xff]
    %v869 = vld [vmem:[%s0 + $0x258] sm:$0xff]
    %v870 = vld [vmem:[%s0 + $0x260] sm:$0xff]
    %v871 = vld [vmem:[%s0 + $0x268] sm:$0xff]
    %v872 = vld [vmem:[%s0 + $0x270] sm:$0xff]
    %v873 = vld [vmem:[%s0 + $0x278] sm:$0xff]
    %v874 = vld [vmem:[%s0 + $0x280] sm:$0xff]
    %v875 = vld [vmem:[%s0 + $0x288] sm:$0xff]
    %v876 = vld [vmem:[%s0 + $0x290] sm:$0xff]
    %v877 = vld [vmem:[%s0 + $0x298] sm:$0xff]
    %v878 = vld [vmem:[%s0 + $0x2a0] sm:$0xff]
    %v879 = vld [vmem:[%s0 + $0x2a8] sm:$0xff]
    %v880 = vld [vmem:[%s0 + $0x2b0] sm:$0xff]
    %v881 = vld [vmem:[%s0 + $0x2b8] sm:$0xff]
    %v882 = vld [vmem:[%s0 + $0x2c0] sm:$0xff]
    %v883 = vld [vmem:[%s0 + $0x2c8] sm:$0xff]
    %v884 = vld [vmem:[%s0 + $0x2d0] sm:$0xff]
    %v885 = vld [vmem:[%s0 + $0x2d8] sm:$0xff]
    %v886 = vld [vmem:[%s0 + $0x2e0] sm:$0xff]
    %v887 = vld [vmem:[%s0 + $0x2e8] sm:$0xff]
    %v888 = vld [vmem:[%s0 + $0x2f0] sm:$0xff]
    %v889 = vld [vmem:[%s0 + $0x2f8] sm:$0xff]
    %v890 = vld [vmem:[%s0 + $0x300] sm:$0xff]
    %v891 = vld [vmem:[%s0 + $0x308] sm:$0xff]
    %v892 = vld [vmem:[%s0 + $0x310] sm:$0xff]
    %v893 = vld [vmem:[%s0 + $0x318] sm:$0xff]
    %v894 = vld [vmem:[%s0 + $0x320] sm:$0xff]
    %v895 = vld [vmem:[%s0 + $0x328] sm:$0xff]
    %v896 = vld [vmem:[%s0 + $0x330] sm:$0xff]
    %v897 = vld [vmem:[%s0 + $0x338] sm:$0xff]
    %v898 = vld [vmem:[%s0 + $0x340] sm:$0xff]
    %v899 = vld [vmem:[%s0 + $0x348] sm:$0xff]
    %v900 = vld [vmem:[%s0 + $0x350] sm:$0xff]
    %v901 = vld [vmem:[%s0 + $0x358] sm:$0xff]
    %v903 = vsel %vm83, %v866, 0
    %v906 = vsel %vm83, %v867, 0
    %v909 = vsel %vm83, %v868, 0
    %v912 = vsel %vm83, %v869, 0
    %v915 = vsel %vm83, %v870, 0
    %v918 = vsel %vm83, %v871, 0
    %v921 = vsel %vm83, %v872, 0
    %v924 = vsel %vm83, %v873, 0
    %v927 = vsel %vm83, %v874, 0
    %v930 = vsel %vm83, %v875, 0
    %v933 = vsel %vm83, %v876, 0
    %v936 = vsel %vm83, %v877, 0
    %v939 = vsel %vm83, %v878, 0
    %v942 = vsel %vm83, %v879, 0
    %v945 = vsel %vm83, %v880, 0
    %v948 = vsel %vm83, %v881, 0
    %v951 = vsel %vm83, %v882, 0
    %v954 = vsel %vm83, %v883, 0
    %v957 = vsel %vm83, %v884, 0
    %v960 = vsel %vm83, %v885, 0
    %v963 = vsel %vm83, %v886, 0
    %v966 = vsel %vm83, %v887, 0
    %v969 = vsel %vm83, %v888, 0
    %v972 = vsel %vm83, %v889, 0
    %v975 = vsel %vm83, %v890, 0
    %v978 = vsel %vm83, %v891, 0
    %v981 = vsel %vm83, %v892, 0
    %v984 = vsel %vm83, %v893, 0
    %v987 = vsel %vm83, %v894, 0
    %v990 = vsel %vm83, %v895, 0
    %v993 = vsel %vm83, %v896, 0
    %v996 = vsel %vm83, %v897, 0
    %v999 = vsel %vm83, %v898, 0
    %v1002 = vsel %vm83, %v899, 0
    %v1005 = vsel %vm83, %v900, 0
    %v1008 = vsel %vm83, %v901, 0
    %1010 = vmatprep.subr.mxu0 0.0
    %1011 = vmatpush1.msra.mxu0 %v12
    %1012 = vmatprep.subr.mxu0 0.0
    %1013 = vmatpush1.msra.mxu0 %v194
    %1014 = vmatprep.subr.mxu0 0.0
    %1015 = vmatpush1.msra.mxu0 0.0
    %1016 = vmatprep.subr.mxu0 0.0
    %1017 = vmatpush1.msra.mxu0 0.0
    %1018 = vmatprep.subr.mxu0 0.0
    %1019 = vmatpush1.msra.mxu0 0.0
    %1020 = vmatprep.subr.mxu0 0.0
    %1021 = vmatpush1.msra.mxu0 0.0
    %1022 = vmatprep.subr.mxu0 0.0
    %1023 = vmatpush1.msra.mxu0 0.0
    %1024 = vmatprep.subr.mxu0 0.0
    %1025 = vmatpush1.msra.mxu0 0.0
    %1026 = vmatprep.subr.mxu0 0.0
    %1027 = vmatpush1.msra.mxu0 0.0
    %1028 = vmatprep.subr.mxu0 0.0
    %1029 = vmatpush1.msra.mxu0 0.0
    %1030 = vmatprep.subr.mxu0 0.0
    %1031 = vmatpush1.msra.mxu0 0.0
    %1032 = vmatprep.subr.mxu0 0.0
    %1033 = vmatpush1.msra.mxu0 0.0
    %1034 = vmatprep.subr.mxu0 0.0
    %1035 = vmatpush1.msra.mxu0 0.0
    %1036 = vmatprep.subr.mxu0 0.0
    %1037 = vmatpush1.msra.mxu0 0.0
    %1038 = vmatprep.subr.mxu0 0.0
    %1039 = vmatpush1.msra.mxu0 0.0
    %1040 = vmatprep.subr.mxu0 0.0
    %1041 = vmatpush1.msra.mxu0 0.0
    %1042 = vmatprep.subr.mxu0 0.0
    %1043 = vmatpush1.msra.mxu0 0.0
    %1044 = vmatprep.subr.mxu0 0.0
    %1045 = vmatpush1.msra.mxu0 0.0
    %1046 = vmatprep.subr.mxu0 0.0
    %1047 = vmatpush1.msra.mxu0 0.0
    %1048 = vmatprep.subr.mxu0 0.0
    %1049 = vmatpush1.msra.mxu0 0.0
    %1050 = vmatprep.subr.mxu0 0.0
    %1051 = vmatpush1.msra.mxu0 0.0
    %1052 = vmatprep.subr.mxu0 0.0
    %1053 = vmatpush1.msra.mxu0 0.0
    %1054 = vmatprep.subr.mxu0 0.0
    %1055 = vmatpush1.msra.mxu0 0.0
    %1056 = vmatprep.subr.mxu0 0.0
    %1057 = vmatpush1.msra.mxu0 0.0
    %1058 = vmatprep.subr.mxu0 0.0
    %1059 = vmatpush1.msra.mxu0 0.0
    %1060 = vmatprep.subr.mxu0 0.0
    %1061 = vmatpush1.msra.mxu0 0.0
    %1062 = vmatprep.subr.mxu0 0.0
    %1063 = vmatpush1.msra.mxu0 0.0
    %1064 = vmatprep.subr.mxu0 0.0
    %1065 = vmatpush1.msra.mxu0 0.0
    %1066 = vmatprep.subr.mxu0 0.0
    %1067 = vmatpush1.msra.mxu0 0.0
    %1068 = vmatprep.subr.mxu0 0.0
    %1069 = vmatpush1.msra.mxu0 0.0
    %1070 = vmatprep.subr.mxu0 0.0
    %1071 = vmatpush1.msra.mxu0 0.0
    %1072 = vmatprep.subr.mxu0 0.0
    %1073 = vmatpush1.msra.mxu0 0.0
    %1074 = vmatprep.mubr.f32.mxu0 0.0
    %1075 = vmatmul.mubr.f32.gmra.mrb[0].mxu0 %v903
    %v1076 = vpop.f32.mrb[0].mxu0
    %v1077 = vadd.f32 0.0, %v1076
    %v1078 = vpop.f32.mrb[0].mxu0
    %1079 = vmatprep.mubr.f32.mxu0 0.0
    %1080 = vmatmul.mubr.f32.gmra.mrb[0].mxu0 %v906
    %v1081 = vpop.f32.mrb[0].mxu0
    %v1082 = vadd.f32 0.0, %v1081
    %v1083 = vpop.f32.mrb[0].mxu0
    %1084 = vmatprep.mubr.f32.mxu0 0.0
    %1085 = vmatmul.mubr.f32.gmra.mrb[0].mxu0 %v909
    %v1086 = vpop.f32.mrb[0].mxu0
    %v1087 = vadd.f32 0.0, %v1086
    %v1088 = vpop.f32.mrb[0].mxu0
    %1089 = vmatprep.mubr.f32.mxu0 0.0
    %1090 = vmatmul.mubr.f32.gmra.mrb[0].mxu0 %v912
    %v1091 = vpop.f32.mrb[0].mxu0
    %v1092 = vadd.f32 0.0, %v1091
    %v1093 = vpop.f32.mrb[0].mxu0
    %1094 = vmatprep.mubr.f32.mxu0 0.0
    %1095 = vmatmul.mubr.f32.gmra.mrb[0].mxu0 %v915
    %v1096 = vpop.f32.mrb[0].mxu0
    %v1097 = vadd.f32 0.0, %v1096
    %v1098 = vpop.f32.mrb[0].mxu0
    %1099 = vmatprep.mubr.f32.mxu0 0.0
    %1100 = vmatmul.mubr.f32.gmra.mrb[0].mxu0 %v918
    %v1101 = vpop.f32.mrb[0].mxu0
    %v1102 = vadd.f32 0.0, %v1101
    %v1103 = vpop.f32.mrb[0].mxu0
    %1104 = vmatprep.mubr.f32.mxu0 0.0
    %1105 = vmatmul.mubr.f32.gmra.mrb[0].mxu0 %v921
    %v1106 = vpop.f32.mrb[0].mxu0
    %v1107 = vadd.f32 0.0, %v1106
    %v1108 = vpop.f32.mrb[0].mxu0
    %1109 = vmatprep.mubr.f32.mxu0 0.0
    %1110 = vmatmul.mubr.f32.gmra.mrb[0].mxu0 %v924
    %v1111 = vpop.f32.mrb[0].mxu0
    %v1112 = vadd.f32 0.0, %v1111
    %v1113 = vpop.f32.mrb[0].mxu0
    %1114 = vmatprep.mubr.f32.mxu0 0.0
    %1115 = vmatmul.mubr.f32.gmra.mrb[0].mxu0 %v927
    %v1116 = vpop.f32.mrb[0].mxu0
    %v1117 = vadd.f32 0.0, %v1116
    %v1118 = vpop.f32.mrb[0].mxu0
    %1119 = vmatprep.mubr.f32.mxu0 0.0
    %1120 = vmatmul.mubr.f32.gmra.mrb[0].mxu0 %v930
    %v1121 = vpop.f32.mrb[0].mxu0
    %v1122 = vadd.f32 0.0, %v1121
    %v1123 = vpop.f32.mrb[0].mxu0
    %1124 = vmatprep.mubr.f32.mxu0 0.0
    %1125 = vmatmul.mubr.f32.gmra.mrb[0].mxu0 %v933
    %v1126 = vpop.f32.mrb[0].mxu0
    %v1127 = vadd.f32 0.0, %v1126
    %v1128 = vpop.f32.mrb[0].mxu0
    %1129 = vmatprep.mubr.f32.mxu0 0.0
    %1130 = vmatmul.mubr.f32.gmra.mrb[0].mxu0 %v936
    %v1131 = vpop.f32.mrb[0].mxu0
    %v1132 = vadd.f32 0.0, %v1131
    %v1133 = vpop.f32.mrb[0].mxu0
    %1134 = vmatprep.mubr.f32.mxu0 0.0
    %1135 = vmatmul.mubr.f32.gmra.mrb[0].mxu0 %v939
    %v1136 = vpop.f32.mrb[0].mxu0
    %v1137 = vadd.f32 0.0, %v1136
    %v1138 = vpop.f32.mrb[0].mxu0
    %1139 = vmatprep.mubr.f32.mxu0 0.0
    %1140 = vmatmul.mubr.f32.gmra.mrb[0].mxu0 %v942
    %v1141 = vpop.f32.mrb[0].mxu0
    %v1142 = vadd.f32 0.0, %v1141
    %v1143 = vpop.f32.mrb[0].mxu0
    %1144 = vmatprep.mubr.f32.mxu0 0.0
    %1145 = vmatmul.mubr.f32.gmra.mrb[0].mxu0 %v945
    %v1146 = vpop.f32.mrb[0].mxu0
    %v1147 = vadd.f32 0.0, %v1146
    %v1148 = vpop.f32.mrb[0].mxu0
    %1149 = vmatprep.mubr.f32.mxu0 0.0
    %1150 = vmatmul.mubr.f32.gmra.mrb[0].mxu0 %v948
    %v1151 = vpop.f32.mrb[0].mxu0
    %v1152 = vadd.f32 0.0, %v1151
    %v1153 = vpop.f32.mrb[0].mxu0
    %1154 = vmatprep.mubr.f32.mxu0 0.0
    %1155 = vmatmul.mubr.f32.gmra.mrb[0].mxu0 %v951
    %v1156 = vpop.f32.mrb[0].mxu0
    %v1157 = vadd.f32 0.0, %v1156
    %v1158 = vpop.f32.mrb[0].mxu0
    %1159 = vmatprep.mubr.f32.mxu0 0.0
    %1160 = vmatmul.mubr.f32.gmra.mrb[0].mxu0 %v954
    %v1161 = vpop.f32.mrb[0].mxu0
    %v1162 = vadd.f32 0.0, %v1161
    %v1163 = vpop.f32.mrb[0].mxu0
    %1164 = vmatprep.mubr.f32.mxu0 0.0
    %1165 = vmatmul.mubr.f32.gmra.mrb[0].mxu0 %v957
    %v1166 = vpop.f32.mrb[0].mxu0
    %v1167 = vadd.f32 0.0, %v1166
    %v1168 = vpop.f32.mrb[0].mxu0
    %1169 = vmatprep.mubr.f32.mxu0 0.0
    %1170 = vmatmul.mubr.f32.gmra.mrb[0].mxu0 %v960
    %v1171 = vpop.f32.mrb[0].mxu0
    %v1172 = vadd.f32 0.0, %v1171
    %v1173 = vpop.f32.mrb[0].mxu0
    %1174 = vmatprep.mubr.f32.mxu0 0.0
    %1175 = vmatmul.mubr.f32.gmra.mrb[0].mxu0 %v963
    %v1176 = vpop.f32.mrb[0].mxu0
    %v1177 = vadd.f32 0.0, %v1176
    %v1178 = vpop.f32.mrb[0].mxu0
    %1179 = vmatprep.mubr.f32.mxu0 0.0
    %1180 = vmatmul.mubr.f32.gmra.mrb[0].mxu0 %v966
    %v1181 = vpop.f32.mrb[0].mxu0
    %v1182 = vadd.f32 0.0, %v1181
    %v1183 = vpop.f32.mrb[0].mxu0
    %1184 = vmatprep.mubr.f32.mxu0 0.0
    %1185 = vmatmul.mubr.f32.gmra.mrb[0].mxu0 %v969
    %v1186 = vpop.f32.mrb[0].mxu0
    %v1187 = vadd.f32 0.0, %v1186
    %v1188 = vpop.f32.mrb[0].mxu0
    %1189 = vmatprep.mubr.f32.mxu0 0.0
    %1190 = vmatmul.mubr.f32.gmra.mrb[0].mxu0 %v972
    %v1191 = vpop.f32.mrb[0].mxu0
    %v1192 = vadd.f32 0.0, %v1191
    %v1193 = vpop.f32.mrb[0].mxu0
    %1194 = vmatprep.mubr.f32.mxu0 0.0
    %1195 = vmatmul.mubr.f32.gmra.mrb[0].mxu0 %v975
    %v1196 = vpop.f32.mrb[0].mxu0
    %v1197 = vadd.f32 0.0, %v1196
    %v1198 = vpop.f32.mrb[0].mxu0
    %1199 = vmatprep.mubr.f32.mxu0 0.0
    %1200 = vmatmul.mubr.f32.gmra.mrb[0].mxu0 %v978
    %v1201 = vpop.f32.mrb[0].mxu0
    %v1202 = vadd.f32 0.0, %v1201
    %v1203 = vpop.f32.mrb[0].mxu0
    %1204 = vmatprep.mubr.f32.mxu0 0.0
    %1205 = vmatmul.mubr.f32.gmra.mrb[0].mxu0 %v981
    %v1206 = vpop.f32.mrb[0].mxu0
    %v1207 = vadd.f32 0.0, %v1206
    %v1208 = vpop.f32.mrb[0].mxu0
    %1209 = vmatprep.mubr.f32.mxu0 0.0
    %1210 = vmatmul.mubr.f32.gmra.mrb[0].mxu0 %v984
    %v1211 = vpop.f32.mrb[0].mxu0
    %v1212 = vadd.f32 0.0, %v1211
    %v1213 = vpop.f32.mrb[0].mxu0
    %1214 = vmatprep.mubr.f32.mxu0 0.0
    %1215 = vmatmul.mubr.f32.gmra.mrb[0].mxu0 %v987
    %v1216 = vpop.f32.mrb[0].mxu0
    %v1217 = vadd.f32 0.0, %v1216
    %v1218 = vpop.f32.mrb[0].mxu0
    %1219 = vmatprep.mubr.f32.mxu0 0.0
    %1220 = vmatmul.mubr.f32.gmra.mrb[0].mxu0 %v990
    %v1221 = vpop.f32.mrb[0].mxu0
    %v1222 = vadd.f32 0.0, %v1221
    %v1223 = vpop.f32.mrb[0].mxu0
    %1224 = vmatprep.mubr.f32.mxu0 0.0
    %1225 = vmatmul.mubr.f32.gmra.mrb[0].mxu0 %v993
    %v1226 = vpop.f32.mrb[0].mxu0
    %v1227 = vadd.f32 0.0, %v1226
    %v1228 = vpop.f32.mrb[0].mxu0
    %1229 = vmatprep.mubr.f32.mxu0 0.0
    %1230 = vmatmul.mubr.f32.gmra.mrb[0].mxu0 %v996
    %v1231 = vpop.f32.mrb[0].mxu0
    %v1232 = vadd.f32 0.0, %v1231
    %v1233 = vpop.f32.mrb[0].mxu0
    %1234 = vmatprep.mubr.f32.mxu0 0.0
    %1235 = vmatmul.mubr.f32.gmra.mrb[0].mxu0 %v999
    %v1236 = vpop.f32.mrb[0].mxu0
    %v1237 = vadd.f32 0.0, %v1236
    %v1238 = vpop.f32.mrb[0].mxu0
    %1239 = vmatprep.mubr.f32.mxu0 0.0
    %1240 = vmatmul.mubr.f32.gmra.mrb[0].mxu0 %v1002
    %v1241 = vpop.f32.mrb[0].mxu0
    %v1242 = vadd.f32 0.0, %v1241
    %v1243 = vpop.f32.mrb[0].mxu0
    %1244 = vmatprep.mubr.f32.mxu0 0.0
    %1245 = vmatmul.mubr.f32.gmra.mrb[0].mxu0 %v1005
    %v1246 = vpop.f32.mrb[0].mxu0
    %v1247 = vadd.f32 0.0, %v1246
    %v1248 = vpop.f32.mrb[0].mxu0
    %1249 = vmatprep.mubr.f32.mxu0 0.0
    %1250 = vmatmul.mubr.f32.gmra.mrb[0].mxu0 %v1008
    %v1251 = vpop.f32.mrb[0].mxu0
    %v1252 = vadd.f32 0.0, %v1251
    %v1253 = vpop.f32.mrb[0].mxu0
    %1254 = vdwg.mxu0
    %v1255 = vmax.f32 %v830, %v1077
    %v1256 = vmax.f32 %v831, %v1082
    %v1257 = vmax.f32 %v832, %v1087
    %v1258 = vmax.f32 %v833, %v1092
    %v1259 = vmax.f32 %v834, %v1097
    %v1260 = vmax.f32 %v835, %v1102
    %v1261 = vmax.f32 %v836, %v1107
    %v1262 = vmax.f32 %v837, %v1112
    %v1263 = vmax.f32 %v838, %v1117
    %v1264 = vmax.f32 %v839, %v1122
    %v1265 = vmax.f32 %v840, %v1127
    %v1266 = vmax.f32 %v841, %v1132
    %v1267 = vmax.f32 %v842, %v1137
    %v1268 = vmax.f32 %v843, %v1142
    %v1269 = vmax.f32 %v844, %v1147
    %v1270 = vmax.f32 %v845, %v1152
    %v1271 = vmax.f32 %v846, %v1157
    %v1272 = vmax.f32 %v847, %v1162
    %v1273 = vmax.f32 %v848, %v1167
    %v1274 = vmax.f32 %v849, %v1172
    %v1275 = vmax.f32 %v850, %v1177
    %v1276 = vmax.f32 %v851, %v1182
    %v1277 = vmax.f32 %v852, %v1187
    %v1278 = vmax.f32 %v853, %v1192
    %v1279 = vmax.f32 %v854, %v1197
    %v1280 = vmax.f32 %v855, %v1202
    %v1281 = vmax.f32 %v856, %v1207
    %v1282 = vmax.f32 %v857, %v1212
    %v1283 = vmax.f32 %v858, %v1217
    %v1284 = vmax.f32 %v859, %v1222
    %v1285 = vmax.f32 %v860, %v1227
    %v1286 = vmax.f32 %v861, %v1232
    %v1287 = vmax.f32 %v862, %v1237
    %v1288 = vmax.f32 %v863, %v1242
    %v1289 = vmax.f32 %v864, %v1247
    %v1290 = vmax.f32 %v865, %v1252
    %v1291 = vld [vmem:[%s0 + $0x360] sm:$0xff]
    %v1292 = vld [vmem:[%s0 + $0x368] sm:$0xff]
    %v1293 = vld [vmem:[%s0 + $0x370] sm:$0xff]
    %v1294 = vld [vmem:[%s0 + $0x378] sm:$0xff]
    %v1295 = vld [vmem:[%s0 + $0x380] sm:$0xff]
    %v1296 = vld [vmem:[%s0 + $0x388] sm:$0xff]
    %v1297 = vld [vmem:[%s0 + $0x390] sm:$0xff]
    %v1298 = vld [vmem:[%s0 + $0x398] sm:$0xff]
    %v1299 = vld [vmem:[%s0 + $0x3a0] sm:$0xff]
    %v1300 = vld [vmem:[%s0 + $0x3a8] sm:$0xff]
    %v1301 = vld [vmem:[%s0 + $0x3b0] sm:$0xff]
    %v1302 = vld [vmem:[%s0 + $0x3b8] sm:$0xff]
    %v1303 = vld [vmem:[%s0 + $0x3c0] sm:$0xff]
    %v1304 = vld [vmem:[%s0 + $0x3c8] sm:$0xff]
    %v1305 = vld [vmem:[%s0 + $0x3d0] sm:$0xff]
    %v1306 = vld [vmem:[%s0 + $0x3d8] sm:$0xff]
    %v1307 = vld [vmem:[%s0 + $0x3e0] sm:$0xff]
    %v1308 = vld [vmem:[%s0 + $0x3e8] sm:$0xff]
    %v1309 = vld [vmem:[%s0 + $0x3f0] sm:$0xff]
    %v1310 = vld [vmem:[%s0 + $0x3f8] sm:$0xff]
    %v1311 = vld [vmem:[%s0 + $0x400] sm:$0xff]
    %v1312 = vld [vmem:[%s0 + $0x408] sm:$0xff]
    %v1313 = vld [vmem:[%s0 + $0x410] sm:$0xff]
    %v1314 = vld [vmem:[%s0 + $0x418] sm:$0xff]
    %v1315 = vld [vmem:[%s0 + $0x420] sm:$0xff]
    %v1316 = vld [vmem:[%s0 + $0x428] sm:$0xff]
    %v1317 = vld [vmem:[%s0 + $0x430] sm:$0xff]
    %v1318 = vld [vmem:[%s0 + $0x438] sm:$0xff]
    %v1319 = vld [vmem:[%s0 + $0x440] sm:$0xff]
    %v1320 = vld [vmem:[%s0 + $0x448] sm:$0xff]
    %v1321 = vld [vmem:[%s0 + $0x450] sm:$0xff]
    %v1322 = vld [vmem:[%s0 + $0x458] sm:$0xff]
    %v1323 = vld [vmem:[%s0 + $0x460] sm:$0xff]
    %v1324 = vld [vmem:[%s0 + $0x468] sm:$0xff]
    %v1325 = vld [vmem:[%s0 + $0x470] sm:$0xff]
    %v1326 = vld [vmem:[%s0 + $0x478] sm:$0xff]
    %v1328 = vsel %vm83, %v1291, 0
    %v1331 = vsel %vm83, %v1292, 0
    %v1334 = vsel %vm83, %v1293, 0
    %v1337 = vsel %vm83, %v1294, 0
    %v1340 = vsel %vm83, %v1295, 0
    %v1343 = vsel %vm83, %v1296, 0
    %v1346 = vsel %vm83, %v1297, 0
    %v1349 = vsel %vm83, %v1298, 0
    %v1352 = vsel %vm83, %v1299, 0
    %v1355 = vsel %vm83, %v1300, 0
    %v1358 = vsel %vm83, %v1301, 0
    %v1361 = vsel %vm83, %v1302, 0
    %v1364 = vsel %vm83, %v1303, 0
    %v1367 = vsel %vm83, %v1304, 0
    %v1370 = vsel %vm83, %v1305, 0
    %v1373 = vsel %vm83, %v1306, 0
    %v1376 = vsel %vm83, %v1307, 0
    %v1379 = vsel %vm83, %v1308, 0
    %v1382 = vsel %vm83, %v1309, 0
    %v1385 = vsel %vm83, %v1310, 0
    %v1388 = vsel %vm83, %v1311, 0
    %v1391 = vsel %vm83, %v1312, 0
    %v1394 = vsel %vm83, %v1313, 0
    %v1397 = vsel %vm83, %v1314, 0
    %v1400 = vsel %vm83, %v1315, 0
    %v1403 = vsel %vm83, %v1316, 0
    %v1406 = vsel %vm83, %v1317, 0
    %v1409 = vsel %vm83, %v1318, 0
    %v1412 = vsel %vm83, %v1319, 0
    %v1415 = vsel %vm83, %v1320, 0
    %v1418 = vsel %vm83, %v1321, 0
    %v1421 = vsel %vm83, %v1322, 0
    %v1424 = vsel %vm83, %v1323, 0
    %v1427 = vsel %vm83, %v1324, 0
    %v1430 = vsel %vm83, %v1325, 0
    %v1433 = vsel %vm83, %v1326, 0
    %1435 = vmatprep.subr.mxu0 0.0
    %1436 = vmatpush1.msra.mxu0 %v12
    %1437 = vmatprep.subr.mxu0 0.0
    %1438 = vmatpush1.msra.mxu0 %v194
    %1439 = vmatprep.subr.mxu0 0.0
    %1440 = vmatpush1.msra.mxu0 0.0
    %1441 = vmatprep.subr.mxu0 0.0
    %1442 = vmatpush1.msra.mxu0 0.0
    %1443 = vmatprep.subr.mxu0 0.0
    %1444 = vmatpush1.msra.mxu0 0.0
    %1445 = vmatprep.subr.mxu0 0.0
    %1446 = vmatpush1.msra.mxu0 0.0
    %1447 = vmatprep.subr.mxu0 0.0
    %1448 = vmatpush1.msra.mxu0 0.0
    %1449 = vmatprep.subr.mxu0 0.0
    %1450 = vmatpush1.msra.mxu0 0.0
    %1451 = vmatprep.subr.mxu0 0.0
    %1452 = vmatpush1.msra.mxu0 0.0
    %1453 = vmatprep.subr.mxu0 0.0
    %1454 = vmatpush1.msra.mxu0 0.0
    %1455 = vmatprep.subr.mxu0 0.0
    %1456 = vmatpush1.msra.mxu0 0.0
    %1457 = vmatprep.subr.mxu0 0.0
    %1458 = vmatpush1.msra.mxu0 0.0
    %1459 = vmatprep.subr.mxu0 0.0
    %1460 = vmatpush1.msra.mxu0 0.0
    %1461 = vmatprep.subr.mxu0 0.0
    %1462 = vmatpush1.msra.mxu0 0.0
    %1463 = vmatprep.subr.mxu0 0.0
    %1464 = vmatpush1.msra.mxu0 0.0
    %1465 = vmatprep.subr.mxu0 0.0
    %1466 = vmatpush1.msra.mxu0 0.0
    %1467 = vmatprep.subr.mxu0 0.0
    %1468 = vmatpush1.msra.mxu0 0.0
    %1469 = vmatprep.subr.mxu0 0.0
    %1470 = vmatpush1.msra.mxu0 0.0
    %1471 = vmatprep.subr.mxu0 0.0
    %1472 = vmatpush1.msra.mxu0 0.0
    %1473 = vmatprep.subr.mxu0 0.0
    %1474 = vmatpush1.msra.mxu0 0.0
    %1475 = vmatprep.subr.mxu0 0.0
    %1476 = vmatpush1.msra.mxu0 0.0
    %1477 = vmatprep.subr.mxu0 0.0
    %1478 = vmatpush1.msra.mxu0 0.0
    %1479 = vmatprep.subr.mxu0 0.0
    %1480 = vmatpush1.msra.mxu0 0.0
    %1481 = vmatprep.subr.mxu0 0.0
    %1482 = vmatpush1.msra.mxu0 0.0
    %1483 = vmatprep.subr.mxu0 0.0
    %1484 = vmatpush1.msra.mxu0 0.0
    %1485 = vmatprep.subr.mxu0 0.0
    %1486 = vmatpush1.msra.mxu0 0.0
    %1487 = vmatprep.subr.mxu0 0.0
    %1488 = vmatpush1.msra.mxu0 0.0
    %1489 = vmatprep.subr.mxu0 0.0
    %1490 = vmatpush1.msra.mxu0 0.0
    %1491 = vmatprep.subr.mxu0 0.0
    %1492 = vmatpush1.msra.mxu0 0.0
    %1493 = vmatprep.subr.mxu0 0.0
    %1494 = vmatpush1.msra.mxu0 0.0
    %1495 = vmatprep.subr.mxu0 0.0
    %1496 = vmatpush1.msra.mxu0 0.0
    %1497 = vmatprep.subr.mxu0 0.0
    %1498 = vmatpush1.msra.mxu0 0.0
    %1499 = vmatprep.mubr.f32.mxu0 0.0
    %1500 = vmatmul.mubr.f32.gmra.mrb[0].mxu0 %v1328
    %v1501 = vpop.f32.mrb[0].mxu0
    %v1502 = vadd.f32 0.0, %v1501
    %v1503 = vpop.f32.mrb[0].mxu0
    %1504 = vmatprep.mubr.f32.mxu0 0.0
    %1505 = vmatmul.mubr.f32.gmra.mrb[0].mxu0 %v1331
    %v1506 = vpop.f32.mrb[0].mxu0
    %v1507 = vadd.f32 0.0, %v1506
    %v1508 = vpop.f32.mrb[0].mxu0
    %1509 = vmatprep.mubr.f32.mxu0 0.0
    %1510 = vmatmul.mubr.f32.gmra.mrb[0].mxu0 %v1334
    %v1511 = vpop.f32.mrb[0].mxu0
    %v1512 = vadd.f32 0.0, %v1511
    %v1513 = vpop.f32.mrb[0].mxu0
    %1514 = vmatprep.mubr.f32.mxu0 0.0
    %1515 = vmatmul.mubr.f32.gmra.mrb[0].mxu0 %v1337
    %v1516 = vpop.f32.mrb[0].mxu0
    %v1517 = vadd.f32 0.0, %v1516
    %v1518 = vpop.f32.mrb[0].mxu0
    %1519 = vmatprep.mubr.f32.mxu0 0.0
    %1520 = vmatmul.mubr.f32.gmra.mrb[0].mxu0 %v1340
    %v1521 = vpop.f32.mrb[0].mxu0
    %v1522 = vadd.f32 0.0, %v1521
    %v1523 = vpop.f32.mrb[0].mxu0
    %1524 = vmatprep.mubr.f32.mxu0 0.0
    %1525 = vmatmul.mubr.f32.gmra.mrb[0].mxu0 %v1343
    %v1526 = vpop.f32.mrb[0].mxu0
    %v1527 = vadd.f32 0.0, %v1526
    %v1528 = vpop.f32.mrb[0].mxu0
    %1529 = vmatprep.mubr.f32.mxu0 0.0
    %1530 = vmatmul.mubr.f32.gmra.mrb[0].mxu0 %v1346
    %v1531 = vpop.f32.mrb[0].mxu0
    %v1532 = vadd.f32 0.0, %v1531
    %v1533 = vpop.f32.mrb[0].mxu0
    %1534 = vmatprep.mubr.f32.mxu0 0.0
    %1535 = vmatmul.mubr.f32.gmra.mrb[0].mxu0 %v1349
    %v1536 = vpop.f32.mrb[0].mxu0
    %v1537 = vadd.f32 0.0, %v1536
    %v1538 = vpop.f32.mrb[0].mxu0
    %1539 = vmatprep.mubr.f32.mxu0 0.0
    %1540 = vmatmul.mubr.f32.gmra.mrb[0].mxu0 %v1352
    %v1541 = vpop.f32.mrb[0].mxu0
    %v1542 = vadd.f32 0.0, %v1541
    %v1543 = vpop.f32.mrb[0].mxu0
    %1544 = vmatprep.mubr.f32.mxu0 0.0
    %1545 = vmatmul.mubr.f32.gmra.mrb[0].mxu0 %v1355
    %v1546 = vpop.f32.mrb[0].mxu0
    %v1547 = vadd.f32 0.0, %v1546
    %v1548 = vpop.f32.mrb[0].mxu0
    %1549 = vmatprep.mubr.f32.mxu0 0.0
    %1550 = vmatmul.mubr.f32.gmra.mrb[0].mxu0 %v1358
    %v1551 = vpop.f32.mrb[0].mxu0
    %v1552 = vadd.f32 0.0, %v1551
    %v1553 = vpop.f32.mrb[0].mxu0
    %1554 = vmatprep.mubr.f32.mxu0 0.0
    %1555 = vmatmul.mubr.f32.gmra.mrb[0].mxu0 %v1361
    %v1556 = vpop.f32.mrb[0].mxu0
    %v1557 = vadd.f32 0.0, %v1556
    %v1558 = vpop.f32.mrb[0].mxu0
    %1559 = vmatprep.mubr.f32.mxu0 0.0
    %1560 = vmatmul.mubr.f32.gmra.mrb[0].mxu0 %v1364
    %v1561 = vpop.f32.mrb[0].mxu0
    %v1562 = vadd.f32 0.0, %v1561
    %v1563 = vpop.f32.mrb[0].mxu0
    %1564 = vmatprep.mubr.f32.mxu0 0.0
    %1565 = vmatmul.mubr.f32.gmra.mrb[0].mxu0 %v1367
    %v1566 = vpop.f32.mrb[0].mxu0
    %v1567 = vadd.f32 0.0, %v1566
    %v1568 = vpop.f32.mrb[0].mxu0
    %1569 = vmatprep.mubr.f32.mxu0 0.0
    %1570 = vmatmul.mubr.f32.gmra.mrb[0].mxu0 %v1370
    %v1571 = vpop.f32.mrb[0].mxu0
    %v1572 = vadd.f32 0.0, %v1571
    %v1573 = vpop.f32.mrb[0].mxu0
    %1574 = vmatprep.mubr.f32.mxu0 0.0
    %1575 = vmatmul.mubr.f32.gmra.mrb[0].mxu0 %v1373
    %v1576 = vpop.f32.mrb[0].mxu0
    %v1577 = vadd.f32 0.0, %v1576
    %v1578 = vpop.f32.mrb[0].mxu0
    %1579 = vmatprep.mubr.f32.mxu0 0.0
    %1580 = vmatmul.mubr.f32.gmra.mrb[0].mxu0 %v1376
    %v1581 = vpop.f32.mrb[0].mxu0
    %v1582 = vadd.f32 0.0, %v1581
    %v1583 = vpop.f32.mrb[0].mxu0
    %1584 = vmatprep.mubr.f32.mxu0 0.0
    %1585 = vmatmul.mubr.f32.gmra.mrb[0].mxu0 %v1379
    %v1586 = vpop.f32.mrb[0].mxu0
    %v1587 = vadd.f32 0.0, %v1586
    %v1588 = vpop.f32.mrb[0].mxu0
    %1589 = vmatprep.mubr.f32.mxu0 0.0
    %1590 = vmatmul.mubr.f32.gmra.mrb[0].mxu0 %v1382
    %v1591 = vpop.f32.mrb[0].mxu0
    %v1592 = vadd.f32 0.0, %v1591
    %v1593 = vpop.f32.mrb[0].mxu0
    %1594 = vmatprep.mubr.f32.mxu0 0.0
    %1595 = vmatmul.mubr.f32.gmra.mrb[0].mxu0 %v1385
    %v1596 = vpop.f32.mrb[0].mxu0
    %v1597 = vadd.f32 0.0, %v1596
    %v1598 = vpop.f32.mrb[0].mxu0
    %1599 = vmatprep.mubr.f32.mxu0 0.0
    %1600 = vmatmul.mubr.f32.gmra.mrb[0].mxu0 %v1388
    %v1601 = vpop.f32.mrb[0].mxu0
    %v1602 = vadd.f32 0.0, %v1601
    %v1603 = vpop.f32.mrb[0].mxu0
    %1604 = vmatprep.mubr.f32.mxu0 0.0
    %1605 = vmatmul.mubr.f32.gmra.mrb[0].mxu0 %v1391
    %v1606 = vpop.f32.mrb[0].mxu0
    %v1607 = vadd.f32 0.0, %v1606
    %v1608 = vpop.f32.mrb[0].mxu0
    %1609 = vmatprep.mubr.f32.mxu0 0.0
    %1610 = vmatmul.mubr.f32.gmra.mrb[0].mxu0 %v1394
    %v1611 = vpop.f32.mrb[0].mxu0
    %v1612 = vadd.f32 0.0, %v1611
    %v1613 = vpop.f32.mrb[0].mxu0
    %1614 = vmatprep.mubr.f32.mxu0 0.0
    %1615 = vmatmul.mubr.f32.gmra.mrb[0].mxu0 %v1397
    %v1616 = vpop.f32.mrb[0].mxu0
    %v1617 = vadd.f32 0.0, %v1616
    %v1618 = vpop.f32.mrb[0].mxu0
    %1619 = vmatprep.mubr.f32.mxu0 0.0
    %1620 = vmatmul.mubr.f32.gmra.mrb[0].mxu0 %v1400
    %v1621 = vpop.f32.mrb[0].mxu0
    %v1622 = vadd.f32 0.0, %v1621
    %v1623 = vpop.f32.mrb[0].mxu0
    %1624 = vmatprep.mubr.f32.mxu0 0.0
    %1625 = vmatmul.mubr.f32.gmra.mrb[0].mxu0 %v1403
    %v1626 = vpop.f32.mrb[0].mxu0
    %v1627 = vadd.f32 0.0, %v1626
    %v1628 = vpop.f32.mrb[0].mxu0
    %1629 = vmatprep.mubr.f32.mxu0 0.0
    %1630 = vmatmul.mubr.f32.gmra.mrb[0].mxu0 %v1406
    %v1631 = vpop.f32.mrb[0].mxu0
    %v1632 = vadd.f32 0.0, %v1631
    %v1633 = vpop.f32.mrb[0].mxu0
    %1634 = vmatprep.mubr.f32.mxu0 0.0
    %1635 = vmatmul.mubr.f32.gmra.mrb[0].mxu0 %v1409
    %v1636 = vpop.f32.mrb[0].mxu0
    %v1637 = vadd.f32 0.0, %v1636
    %v1638 = vpop.f32.mrb[0].mxu0
    %1639 = vmatprep.mubr.f32.mxu0 0.0
    %1640 = vmatmul.mubr.f32.gmra.mrb[0].mxu0 %v1412
    %v1641 = vpop.f32.mrb[0].mxu0
    %v1642 = vadd.f32 0.0, %v1641
    %v1643 = vpop.f32.mrb[0].mxu0
    %1644 = vmatprep.mubr.f32.mxu0 0.0
    %1645 = vmatmul.mubr.f32.gmra.mrb[0].mxu0 %v1415
    %v1646 = vpop.f32.mrb[0].mxu0
    %v1647 = vadd.f32 0.0, %v1646
    %v1648 = vpop.f32.mrb[0].mxu0
    %1649 = vmatprep.mubr.f32.mxu0 0.0
    %1650 = vmatmul.mubr.f32.gmra.mrb[0].mxu0 %v1418
    %v1651 = vpop.f32.mrb[0].mxu0
    %v1652 = vadd.f32 0.0, %v1651
    %v1653 = vpop.f32.mrb[0].mxu0
    %1654 = vmatprep.mubr.f32.mxu0 0.0
    %1655 = vmatmul.mubr.f32.gmra.mrb[0].mxu0 %v1421
    %v1656 = vpop.f32.mrb[0].mxu0
    %v1657 = vadd.f32 0.0, %v1656
    %v1658 = vpop.f32.mrb[0].mxu0
    %1659 = vmatprep.mubr.f32.mxu0 0.0
    %1660 = vmatmul.mubr.f32.gmra.mrb[0].mxu0 %v1424
    %v1661 = vpop.f32.mrb[0].mxu0
    %v1662 = vadd.f32 0.0, %v1661
    %v1663 = vpop.f32.mrb[0].mxu0
    %1664 = vmatprep.mubr.f32.mxu0 0.0
    %1665 = vmatmul.mubr.f32.gmra.mrb[0].mxu0 %v1427
    %v1666 = vpop.f32.mrb[0].mxu0
    %v1667 = vadd.f32 0.0, %v1666
    %v1668 = vpop.f32.mrb[0].mxu0
    %1669 = vmatprep.mubr.f32.mxu0 0.0
    %1670 = vmatmul.mubr.f32.gmra.mrb[0].mxu0 %v1430
    %v1671 = vpop.f32.mrb[0].mxu0
    %v1672 = vadd.f32 0.0, %v1671
    %v1673 = vpop.f32.mrb[0].mxu0
    %1674 = vmatprep.mubr.f32.mxu0 0.0
    %1675 = vmatmul.mubr.f32.gmra.mrb[0].mxu0 %v1433
    %v1676 = vpop.f32.mrb[0].mxu0
    %v1677 = vadd.f32 0.0, %v1676
    %v1678 = vpop.f32.mrb[0].mxu0
    %1679 = vdwg.mxu0
    %v1680 = vmax.f32 %v1255, %v1502
    %v1681 = vmax.f32 %v1256, %v1507
    %v1682 = vmax.f32 %v1257, %v1512
    %v1683 = vmax.f32 %v1258, %v1517
    %v1684 = vmax.f32 %v1259, %v1522
    %v1685 = vmax.f32 %v1260, %v1527
    %v1686 = vmax.f32 %v1261, %v1532
    %v1687 = vmax.f32 %v1262, %v1537
    %v1688 = vmax.f32 %v1263, %v1542
    %v1689 = vmax.f32 %v1264, %v1547
    %v1690 = vmax.f32 %v1265, %v1552
    %v1691 = vmax.f32 %v1266, %v1557
    %v1692 = vmax.f32 %v1267, %v1562
    %v1693 = vmax.f32 %v1268, %v1567
    %v1694 = vmax.f32 %v1269, %v1572
    %v1695 = vmax.f32 %v1270, %v1577
    %v1696 = vmax.f32 %v1271, %v1582
    %v1697 = vmax.f32 %v1272, %v1587
    %v1698 = vmax.f32 %v1273, %v1592
    %v1699 = vmax.f32 %v1274, %v1597
    %v1700 = vmax.f32 %v1275, %v1602
    %v1701 = vmax.f32 %v1276, %v1607
    %v1702 = vmax.f32 %v1277, %v1612
    %v1703 = vmax.f32 %v1278, %v1617
    %v1704 = vmax.f32 %v1279, %v1622
    %v1705 = vmax.f32 %v1280, %v1627
    %v1706 = vmax.f32 %v1281, %v1632
    %v1707 = vmax.f32 %v1282, %v1637
    %v1708 = vmax.f32 %v1283, %v1642
    %v1709 = vmax.f32 %v1284, %v1647
    %v1710 = vmax.f32 %v1285, %v1652
    %v1711 = vmax.f32 %v1286, %v1657
    %v1712 = vmax.f32 %v1287, %v1662
    %v1713 = vmax.f32 %v1288, %v1667
    %v1714 = vmax.f32 %v1289, %v1672
    %v1715 = vmax.f32 %v1290, %v1677
    %v1716 = vlaneseq
    %v1717 = vshrl.u32 %v1716, 7
    %v1718 = vsub.s32 0, %v1717
    %v1719 = vrot.slane %v14, %v1718
    %v1720 = vadd.f32 %v1680, %v1719
    %v1721 = vadd.f32 %v1681, %v1719
    %v1722 = vadd.f32 %v1682, %v1719
    %v1723 = vadd.f32 %v1683, %v1719
    %v1724 = vadd.f32 %v1684, %v1719
    %v1725 = vadd.f32 %v1685, %v1719
    %v1726 = vadd.f32 %v1686, %v1719
    %v1727 = vadd.f32 %v1687, %v1719
    %v1728 = vadd.f32 %v1688, %v1719
    %v1729 = vadd.f32 %v1689, %v1719
    %v1730 = vadd.f32 %v1690, %v1719
    %v1731 = vadd.f32 %v1691, %v1719
    %v1732 = vadd.f32 %v1692, %v1719
    %v1733 = vadd.f32 %v1693, %v1719
    %v1734 = vadd.f32 %v1694, %v1719
    %v1735 = vadd.f32 %v1695, %v1719
    %v1736 = vadd.f32 %v1696, %v1719
    %v1737 = vadd.f32 %v1697, %v1719
    %v1738 = vadd.f32 %v1698, %v1719
    %v1739 = vadd.f32 %v1699, %v1719
    %v1740 = vadd.f32 %v1700, %v1719
    %v1741 = vadd.f32 %v1701, %v1719
    %v1742 = vadd.f32 %v1702, %v1719
    %v1743 = vadd.f32 %v1703, %v1719
    %v1744 = vadd.f32 %v1704, %v1719
    %v1745 = vadd.f32 %v1705, %v1719
    %v1746 = vadd.f32 %v1706, %v1719
    %v1747 = vadd.f32 %v1707, %v1719
    %v1748 = vadd.f32 %v1708, %v1719
    %v1749 = vadd.f32 %v1709, %v1719
    %v1750 = vadd.f32 %v1710, %v1719
    %v1751 = vadd.f32 %v1711, %v1719
    %v1752 = vadd.f32 %v1712, %v1719
    %v1753 = vadd.f32 %v1713, %v1719
    %v1754 = vadd.f32 %v1714, %v1719
    %v1755 = vadd.f32 %v1715, %v1719
    %v1756 = vtanh.pop %v1720
    %v1757 = vtanh.pop %v1721
    %v1758 = vtanh.pop %v1722
    %v1759 = vtanh.pop %v1723
    %v1760 = vtanh.pop %v1724
    %v1761 = vtanh.pop %v1725
    %v1762 = vtanh.pop %v1726
    %v1763 = vtanh.pop %v1727
    %v1764 = vtanh.pop %v1728
    %v1765 = vtanh.pop %v1729
    %v1766 = vtanh.pop %v1730
    %v1767 = vtanh.pop %v1731
    %v1768 = vtanh.pop %v1732
    %v1769 = vtanh.pop %v1733
    %v1770 = vtanh.pop %v1734
    %v1771 = vtanh.pop %v1735
    %v1772 = vtanh.pop %v1736
    %v1773 = vtanh.pop %v1737
    %v1774 = vtanh.pop %v1738
    %v1775 = vtanh.pop %v1739
    %v1776 = vtanh.pop %v1740
    %v1777 = vtanh.pop %v1741
    %v1778 = vtanh.pop %v1742
    %v1779 = vtanh.pop %v1743
    %v1780 = vtanh.pop %v1744
    %v1781 = vtanh.pop %v1745
    %v1782 = vtanh.pop %v1746
    %v1783 = vtanh.pop %v1747
    %v1784 = vtanh.pop %v1748
    %v1785 = vtanh.pop %v1749
    %v1786 = vtanh.pop %v1750
    %v1787 = vtanh.pop %v1751
    %v1788 = vtanh.pop %v1752
    %v1789 = vtanh.pop %v1753
    %v1790 = vtanh.pop %v1754
    %v1791 = vtanh.pop %v1755
    %vm1792 = vcmask 56320
    %1793 = vst.msk [vmem:[#allocation2] sm:$0xff] %vm1792, %v1756
    %1794 = vst.msk [vmem:[#allocation2 + $0x8] sm:$0xff] %vm1792, %v1757
    %1795 = vst.msk [vmem:[#allocation2 + $0x10] sm:$0xff] %vm1792, %v1758
    %1796 = vst.msk [vmem:[#allocation2 + $0x18] sm:$0xff] %vm1792, %v1759
    %1801 = vrot.lane.b32.xlu0 %v1760, 7
    %v1802 = vpop.permute.xlu0 %1801
    %1803 = vrot.lane.b32.xlu0 %v1761, 7
    %v1804 = vpop.permute.xlu0 %1803
    %1805 = vrot.lane.b32.xlu0 %v1762, 7
    %v1806 = vpop.permute.xlu0 %1805
    %1807 = vrot.lane.b32.xlu0 %v1763, 7
    %v1808 = vpop.permute.xlu0 %1807
    %vm1813 = vcmask 113720
    %1814 = vst.msk [vmem:[#allocation2] sm:$0xff] %vm1813, %v1802
    %1815 = vst.msk [vmem:[#allocation2 + $0x8] sm:$0xff] %vm1813, %v1804
    %1816 = vst.msk [vmem:[#allocation2 + $0x10] sm:$0xff] %vm1813, %v1806
    %1817 = vst.msk [vmem:[#allocation2 + $0x18] sm:$0xff] %vm1813, %v1808
    %1822 = vrot.lane.b32.xlu0 %v1764, 14
    %v1823 = vpop.permute.xlu0 %1822
    %1824 = vrot.lane.b32.xlu0 %v1765, 14
    %v1825 = vpop.permute.xlu0 %1824
    %1826 = vrot.lane.b32.xlu0 %v1766, 14
    %v1827 = vpop.permute.xlu0 %1826
    %1828 = vrot.lane.b32.xlu0 %v1767, 14
    %v1829 = vpop.permute.xlu0 %1828
    %vm1834 = vcmask 171120
    %1835 = vst.msk [vmem:[#allocation2] sm:$0xff] %vm1834, %v1823
    %1836 = vst.msk [vmem:[#allocation2 + $0x8] sm:$0xff] %vm1834, %v1825
    %1837 = vst.msk [vmem:[#allocation2 + $0x10] sm:$0xff] %vm1834, %v1827
    %1838 = vst.msk [vmem:[#allocation2 + $0x18] sm:$0xff] %vm1834, %v1829
    %1843 = vrot.lane.b32.xlu0 %v1768, 21
    %v1844 = vpop.permute.xlu0 %1843
    %1845 = vrot.lane.b32.xlu0 %v1769, 21
    %v1846 = vpop.permute.xlu0 %1845
    %1847 = vrot.lane.b32.xlu0 %v1770, 21
    %v1848 = vpop.permute.xlu0 %1847
    %1849 = vrot.lane.b32.xlu0 %v1771, 21
    %v1850 = vpop.permute.xlu0 %1849
    %vm1855 = vcmask 228520
    %1856 = vst.msk [vmem:[#allocation2] sm:$0xff] %vm1855, %v1844
    %1857 = vst.msk [vmem:[#allocation2 + $0x8] sm:$0xff] %vm1855, %v1846
    %1858 = vst.msk [vmem:[#allocation2 + $0x10] sm:$0xff] %vm1855, %v1848
    %1859 = vst.msk [vmem:[#allocation2 + $0x18] sm:$0xff] %vm1855, %v1850
    %1864 = vrot.lane.b32.xlu0 %v1772, 28
    %v1865 = vpop.permute.xlu0 %1864
    %1866 = vrot.lane.b32.xlu0 %v1773, 28
    %v1867 = vpop.permute.xlu0 %1866
    %1868 = vrot.lane.b32.xlu0 %v1774, 28
    %v1869 = vpop.permute.xlu0 %1868
    %1870 = vrot.lane.b32.xlu0 %v1775, 28
    %v1871 = vpop.permute.xlu0 %1870
    %vm1876 = vcmask 285920
    %1877 = vst.msk [vmem:[#allocation2] sm:$0xff] %vm1876, %v1865
    %1878 = vst.msk [vmem:[#allocation2 + $0x8] sm:$0xff] %vm1876, %v1867
    %1879 = vst.msk [vmem:[#allocation2 + $0x10] sm:$0xff] %vm1876, %v1869
    %1880 = vst.msk [vmem:[#allocation2 + $0x18] sm:$0xff] %vm1876, %v1871
    %1885 = vrot.lane.b32.xlu0 %v1776, 35
    %v1886 = vpop.permute.xlu0 %1885
    %1887 = vrot.lane.b32.xlu0 %v1777, 35
    %v1888 = vpop.permute.xlu0 %1887
    %1889 = vrot.lane.b32.xlu0 %v1778, 35
    %v1890 = vpop.permute.xlu0 %1889
    %1891 = vrot.lane.b32.xlu0 %v1779, 35
    %v1892 = vpop.permute.xlu0 %1891
    %vm1897 = vcmask 343320
    %1898 = vst.msk [vmem:[#allocation2] sm:$0xff] %vm1897, %v1886
    %1899 = vst.msk [vmem:[#allocation2 + $0x8] sm:$0xff] %vm1897, %v1888
    %1900 = vst.msk [vmem:[#allocation2 + $0x10] sm:$0xff] %vm1897, %v1890
    %1901 = vst.msk [vmem:[#allocation2 + $0x18] sm:$0xff] %vm1897, %v1892
    %1906 = vrot.lane.b32.xlu0 %v1780, 42
    %v1907 = vpop.permute.xlu0 %1906
    %1908 = vrot.lane.b32.xlu0 %v1781, 42
    %v1909 = vpop.permute.xlu0 %1908
    %1910 = vrot.lane.b32.xlu0 %v1782, 42
    %v1911 = vpop.permute.xlu0 %1910
    %1912 = vrot.lane.b32.xlu0 %v1783, 42
    %v1913 = vpop.permute.xlu0 %1912
    %vm1918 = vcmask 400720
    %1919 = vst.msk [vmem:[#allocation2] sm:$0xff] %vm1918, %v1907
    %1920 = vst.msk [vmem:[#allocation2 + $0x8] sm:$0xff] %vm1918, %v1909
    %1921 = vst.msk [vmem:[#allocation2 + $0x10] sm:$0xff] %vm1918, %v1911
    %1922 = vst.msk [vmem:[#allocation2 + $0x18] sm:$0xff] %vm1918, %v1913
    %1927 = vrot.lane.b32.xlu0 %v1784, 49
    %v1928 = vpop.permute.xlu0 %1927
    %1929 = vrot.lane.b32.xlu0 %v1785, 49
    %v1930 = vpop.permute.xlu0 %1929
    %1931 = vrot.lane.b32.xlu0 %v1786, 49
    %v1932 = vpop.permute.xlu0 %1931
    %1933 = vrot.lane.b32.xlu0 %v1787, 49
    %v1934 = vpop.permute.xlu0 %1933
    %vm1939 = vcmask 458120
    %1940 = vst.msk [vmem:[#allocation2] sm:$0xff] %vm1939, %v1928
    %1941 = vst.msk [vmem:[#allocation2 + $0x8] sm:$0xff] %vm1939, %v1930
    %1942 = vst.msk [vmem:[#allocation2 + $0x10] sm:$0xff] %vm1939, %v1932
    %1943 = vst.msk [vmem:[#allocation2 + $0x18] sm:$0xff] %vm1939, %v1934
    %1948 = vrot.lane.b32.xlu0 %v1788, 56
    %v1949 = vpop.permute.xlu0 %1948
    %1950 = vrot.lane.b32.xlu0 %v1789, 56
    %v1951 = vpop.permute.xlu0 %1950
    %1952 = vrot.lane.b32.xlu0 %v1790, 56
    %v1953 = vpop.permute.xlu0 %1952
    %1954 = vrot.lane.b32.xlu0 %v1791, 56
    %v1955 = vpop.permute.xlu0 %1954
    %vm1960 = vcmask 515520
    %1961 = vst.msk [vmem:[#allocation2] sm:$0xff] %vm1960, %v1949
    %1962 = vst.msk [vmem:[#allocation2 + $0x8] sm:$0xff] %vm1960, %v1951
    %1963 = vst.msk [vmem:[#allocation2 + $0x10] sm:$0xff] %vm1960, %v1953
    %1964 = vst.msk [vmem:[#allocation2 + $0x18] sm:$0xff] %vm1960, %v1955
    %v1965 = vld [vmem:[#allocation2] sm:$0xff]
    %v1966 = vld [vmem:[#allocation2 + $0x8] sm:$0xff]
    %v1967 = vld [vmem:[#allocation2 + $0x10] sm:$0xff]
    %v1968 = vld [vmem:[#allocation2 + $0x18] sm:$0xff]
    %v1969 = vlaneseq
    %v1970 = vshrl.u32 %v1969, 7
    %v1971 = vsub.s32 0, %v1970
    %v1972 = vrot.slane %v23, %v1971
    %vm1973 = vcmask 515072
    %v1975 = vsel %vm1973, %v1965, 0
    %v1978 = vsel %vm1973, %v1966, 0
    %v1981 = vsel %vm1973, %v1967, 0
    %v1984 = vsel %vm1973, %v1968, 0
    %vm1986 = vcmask 1046528
    %v1988 = vsel %vm1986, %v22, 0
    %1990 = vmatprep.subr.mxu0 0.0
    %1991 = vmatpush1.msra.mxu0 %v15
    %1992 = vmatprep.subr.mxu0 0.0
    %1993 = vmatpush1.msra.mxu0 %v16
    %1994 = vmatprep.subr.mxu0 0.0
    %1995 = vmatpush1.msra.mxu0 %v17
    %1996 = vmatprep.subr.mxu0 0.0
    %1997 = vmatpush1.msra.mxu0 %v18
    %1998 = vmatprep.subr.mxu0 0.0
    %1999 = vmatpush1.msra.mxu0 %v19
    %2000 = vmatprep.subr.mxu0 0.0
    %2001 = vmatpush1.msra.mxu0 %v20
    %2002 = vmatprep.subr.mxu0 0.0
    %2003 = vmatpush1.msra.mxu0 %v21
    %2004 = vmatprep.subr.mxu0 0.0
    %2005 = vmatpush1.msra.mxu0 %v1988
    %2006 = vmatprep.subr.mxu0 0.0
    %2007 = vmatpush1.msra.mxu0 0.0
    %2008 = vmatprep.subr.mxu0 0.0
    %2009 = vmatpush1.msra.mxu0 0.0
    %2010 = vmatprep.subr.mxu0 0.0
    %2011 = vmatpush1.msra.mxu0 0.0
    %2012 = vmatprep.subr.mxu0 0.0
    %2013 = vmatpush1.msra.mxu0 0.0
    %2014 = vmatprep.subr.mxu0 0.0
    %2015 = vmatpush1.msra.mxu0 0.0
    %2016 = vmatprep.subr.mxu0 0.0
    %2017 = vmatpush1.msra.mxu0 0.0
    %2018 = vmatprep.subr.mxu0 0.0
    %2019 = vmatpush1.msra.mxu0 0.0
    %2020 = vmatprep.subr.mxu0 0.0
    %2021 = vmatpush1.msra.mxu0 0.0
    %2022 = vmatprep.subr.mxu0 0.0
    %2023 = vmatpush1.msra.mxu0 0.0
    %2024 = vmatprep.subr.mxu0 0.0
    %2025 = vmatpush1.msra.mxu0 0.0
    %2026 = vmatprep.subr.mxu0 0.0
    %2027 = vmatpush1.msra.mxu0 0.0
    %2028 = vmatprep.subr.mxu0 0.0
    %2029 = vmatpush1.msra.mxu0 0.0
    %2030 = vmatprep.subr.mxu0 0.0
    %2031 = vmatpush1.msra.mxu0 0.0
    %2032 = vmatprep.subr.mxu0 0.0
    %2033 = vmatpush1.msra.mxu0 0.0
    %2034 = vmatprep.subr.mxu0 0.0
    %2035 = vmatpush1.msra.mxu0 0.0
    %2036 = vmatprep.subr.mxu0 0.0
    %2037 = vmatpush1.msra.mxu0 0.0
    %2038 = vmatprep.subr.mxu0 0.0
    %2039 = vmatpush1.msra.mxu0 0.0
    %2040 = vmatprep.subr.mxu0 0.0
    %2041 = vmatpush1.msra.mxu0 0.0
    %2042 = vmatprep.subr.mxu0 0.0
    %2043 = vmatpush1.msra.mxu0 0.0
    %2044 = vmatprep.subr.mxu0 0.0
    %2045 = vmatpush1.msra.mxu0 0.0
    %2046 = vmatprep.subr.mxu0 0.0
    %2047 = vmatpush1.msra.mxu0 0.0
    %2048 = vmatprep.subr.mxu0 0.0
    %2049 = vmatpush1.msra.mxu0 0.0
    %2050 = vmatprep.subr.mxu0 0.0
    %2051 = vmatpush1.msra.mxu0 0.0
    %2052 = vmatprep.subr.mxu0 0.0
    %2053 = vmatpush1.msra.mxu0 0.0
    %2054 = vmatprep.mubr.f32.mxu0 0.0
    %2055 = vmatmul.mubr.f32.gmra.mrb[0].mxu0 %v1975
    %v2056 = vpop.f32.mrb[0].mxu0
    %v2057 = vadd.f32 %v1972, %v2056
    %v2058 = vpop.f32.mrb[0].mxu0
    %2059 = vmatprep.mubr.f32.mxu0 0.0
    %2060 = vmatmul.mubr.f32.gmra.mrb[0].mxu0 %v1978
    %v2061 = vpop.f32.mrb[0].mxu0
    %v2062 = vadd.f32 %v1972, %v2061
    %v2063 = vpop.f32.mrb[0].mxu0
    %2064 = vmatprep.mubr.f32.mxu0 0.0
    %2065 = vmatmul.mubr.f32.gmra.mrb[0].mxu0 %v1981
    %v2066 = vpop.f32.mrb[0].mxu0
    %v2067 = vadd.f32 %v1972, %v2066
    %v2068 = vpop.f32.mrb[0].mxu0
    %2069 = vmatprep.mubr.f32.mxu0 0.0
    %2070 = vmatmul.mubr.f32.gmra.mrb[0].mxu0 %v1984
    %v2071 = vpop.f32.mrb[0].mxu0
    %v2072 = vadd.f32 %v1972, %v2071
    %v2073 = vpop.f32.mrb[0].mxu0
    %2074 = vdwg.mxu0
    %vm2075 = vcmask 109568
    %v2076 = vsel %vm2075, %v2057, -inf
    %v2077 = vrot.slane %v2076, 4
    %v2078 = vmax.f32 %v2076, %v2077
    %v2079 = vrot.slane %v2078, 2
    %v2080 = vmax.f32 %v2078, %v2079
    %v2081 = vrot.slane %v2080, 1
    %v2082 = vmax.f32 %v2080, %v2081
    %vm2083 = vcmask 106496
    %2084 = vst.msk [vmem:[#allocation3] sm:$0x1] %vm2083, %v2082
    %vm2085 = vcmask 113668
    %v2086 = vsel %vm2085, %v2057, -inf
    %v2087 = vrot.slane %v2086, 4
    %v2088 = vmax.f32 %v2086, %v2087
    %v2089 = vrot.slane %v2088, 2
    %v2090 = vmax.f32 %v2088, %v2089
    %v2091 = vrot.slane %v2090, 1
    %v2092 = vmax.f32 %v2090, %v2091
    %2094 = vrot.lane.b32.xlu0 %v2092, 14
    %v2095 = vpop.permute.xlu0 %2094
    %vm2097 = vcmask 221296
    %2098 = vst.msk [vmem:[#allocation3] sm:$0x1] %vm2097, %v2095
    %v2099 = vsel %vm2075, %v2062, -inf
    %v2100 = vrot.slane %v2099, 4
    %v2101 = vmax.f32 %v2099, %v2100
    %v2102 = vrot.slane %v2101, 2
    %v2103 = vmax.f32 %v2101, %v2102
    %v2104 = vrot.slane %v2103, 1
    %v2105 = vmax.f32 %v2103, %v2104
    %2107 = vrot.lane.b32.xlu0 %v2105, 28
    %v2108 = vpop.permute.xlu0 %2107
    %vm2110 = vcmask 336096
    %2111 = vst.msk [vmem:[#allocation3] sm:$0x1] %vm2110, %v2108
    %v2112 = vsel %vm2085, %v2062, -inf
    %v2113 = vrot.slane %v2112, 4
    %v2114 = vmax.f32 %v2112, %v2113
    %v2115 = vrot.slane %v2114, 2
    %v2116 = vmax.f32 %v2114, %v2115
    %v2117 = vrot.slane %v2116, 1
    %v2118 = vmax.f32 %v2116, %v2117
    %2120 = vrot.lane.b32.xlu0 %v2118, 42
    %v2121 = vpop.permute.xlu0 %2120
    %vm2123 = vcmask 450896
    %2124 = vst.msk [vmem:[#allocation3] sm:$0x1] %vm2123, %v2121
    %v2125 = vsel %vm2075, %v2067, -inf
    %v2126 = vrot.slane %v2125, 4
    %v2127 = vmax.f32 %v2125, %v2126
    %v2128 = vrot.slane %v2127, 2
    %v2129 = vmax.f32 %v2127, %v2128
    %v2130 = vrot.slane %v2129, 1
    %v2131 = vmax.f32 %v2129, %v2130
    %2132 = vst.msk [vmem:[#allocation3 + $0x1] sm:$0x1] %vm2083, %v2131
    %v2133 = vsel %vm2085, %v2067, -inf
    %v2134 = vrot.slane %v2133, 4
    %v2135 = vmax.f32 %v2133, %v2134
    %v2136 = vrot.slane %v2135, 2
    %v2137 = vmax.f32 %v2135, %v2136
    %v2138 = vrot.slane %v2137, 1
    %v2139 = vmax.f32 %v2137, %v2138
    %2141 = vrot.lane.b32.xlu0 %v2139, 14
    %v2142 = vpop.permute.xlu0 %2141
    %2144 = vst.msk [vmem:[#allocation3 + $0x1] sm:$0x1] %vm2097, %v2142
    %v2145 = vsel %vm2075, %v2072, -inf
    %v2146 = vrot.slane %v2145, 4
    %v2147 = vmax.f32 %v2145, %v2146
    %v2148 = vrot.slane %v2147, 2
    %v2149 = vmax.f32 %v2147, %v2148
    %v2150 = vrot.slane %v2149, 1
    %v2151 = vmax.f32 %v2149, %v2150
    %2153 = vrot.lane.b32.xlu0 %v2151, 28
    %v2154 = vpop.permute.xlu0 %2153
    %2156 = vst.msk [vmem:[#allocation3 + $0x1] sm:$0x1] %vm2110, %v2154
    %v2157 = vsel %vm2085, %v2072, -inf
    %v2158 = vrot.slane %v2157, 4
    %v2159 = vmax.f32 %v2157, %v2158
    %v2160 = vrot.slane %v2159, 2
    %v2161 = vmax.f32 %v2159, %v2160
    %v2162 = vrot.slane %v2161, 1
    %v2163 = vmax.f32 %v2161, %v2162
    %2165 = vrot.lane.b32.xlu0 %v2163, 42
    %v2166 = vpop.permute.xlu0 %2165
    %2168 = vst.msk [vmem:[#allocation3 + $0x1] sm:$0x1] %vm2123, %v2166
    %v2169 = vld [vmem:[#allocation3] sm:$0x3]
    %v2170 = vmax.f32 %v2169, 0.0
    %v2171 = vlaneseq
    %v2172 = vshrl.u32 %v2171, 7
    %v2173 = vsub.s32 0, %v2172
    %v2174 = vrot.slane %v31, %v2173
    %vm2175 = vcmask 457728
    %v2177 = vsel %vm2175, %v2170, 0
    %2179 = vmatprep.subr.mxu0 0.0
    %2180 = vmatpush1.msra.mxu0 %v24
    %2181 = vmatprep.subr.mxu0 0.0
    %2182 = vmatpush1.msra.mxu0 %v25
    %2183 = vmatprep.subr.mxu0 0.0
    %2184 = vmatpush1.msra.mxu0 %v26
    %2185 = vmatprep.subr.mxu0 0.0
    %2186 = vmatpush1.msra.mxu0 %v27
    %2187 = vmatprep.subr.mxu0 0.0
    %2188 = vmatpush1.msra.mxu0 %v28
    %2189 = vmatprep.subr.mxu0 0.0
    %2190 = vmatpush1.msra.mxu0 %v29
    %2191 = vmatprep.subr.mxu0 0.0
    %2192 = vmatpush1.msra.mxu0 %v30
    %2193 = vmatprep.subr.mxu0 0.0
    %2194 = vmatpush1.msra.mxu0 0.0
    %2195 = vmatprep.subr.mxu0 0.0
    %2196 = vmatpush1.msra.mxu0 0.0
    %2197 = vmatprep.subr.mxu0 0.0
    %2198 = vmatpush1.msra.mxu0 0.0
    %2199 = vmatprep.subr.mxu0 0.0
    %2200 = vmatpush1.msra.mxu0 0.0
    %2201 = vmatprep.subr.mxu0 0.0
    %2202 = vmatpush1.msra.mxu0 0.0
    %2203 = vmatprep.subr.mxu0 0.0
    %2204 = vmatpush1.msra.mxu0 0.0
    %2205 = vmatprep.subr.mxu0 0.0
    %2206 = vmatpush1.msra.mxu0 0.0
    %2207 = vmatprep.subr.mxu0 0.0
    %2208 = vmatpush1.msra.mxu0 0.0
    %2209 = vmatprep.subr.mxu0 0.0
    %2210 = vmatpush1.msra.mxu0 0.0
    %2211 = vmatprep.subr.mxu0 0.0
    %2212 = vmatpush1.msra.mxu0 0.0
    %2213 = vmatprep.subr.mxu0 0.0
    %2214 = vmatpush1.msra.mxu0 0.0
    %2215 = vmatprep.subr.mxu0 0.0
    %2216 = vmatpush1.msra.mxu0 0.0
    %2217 = vmatprep.subr.mxu0 0.0
    %2218 = vmatpush1.msra.mxu0 0.0
    %2219 = vmatprep.subr.mxu0 0.0
    %2220 = vmatpush1.msra.mxu0 0.0
    %2221 = vmatprep.subr.mxu0 0.0
    %2222 = vmatpush1.msra.mxu0 0.0
    %2223 = vmatprep.subr.mxu0 0.0
    %2224 = vmatpush1.msra.mxu0 0.0
    %2225 = vmatprep.subr.mxu0 0.0
    %2226 = vmatpush1.msra.mxu0 0.0
    %2227 = vmatprep.subr.mxu0 0.0
    %2228 = vmatpush1.msra.mxu0 0.0
    %2229 = vmatprep.subr.mxu0 0.0
    %2230 = vmatpush1.msra.mxu0 0.0
    %2231 = vmatprep.subr.mxu0 0.0
    %2232 = vmatpush1.msra.mxu0 0.0
    %2233 = vmatprep.subr.mxu0 0.0
    %2234 = vmatpush1.msra.mxu0 0.0
    %2235 = vmatprep.subr.mxu0 0.0
    %2236 = vmatpush1.msra.mxu0 0.0
    %2237 = vmatprep.subr.mxu0 0.0
    %2238 = vmatpush1.msra.mxu0 0.0
    %2239 = vmatprep.subr.mxu0 0.0
    %2240 = vmatpush1.msra.mxu0 0.0
    %2241 = vmatprep.subr.mxu0 0.0
    %2242 = vmatpush1.msra.mxu0 0.0
    %2243 = vmatprep.mubr.f32.mxu0 0.0
    %2244 = vmatmul.mubr.f32.gmra.mrb[0].mxu0 %v2177
    %v2245 = vpop.f32.mrb[0].mxu0
    %v2246 = vadd.f32 %v2174, %v2245
    %v2247 = vpop.f32.mrb[0].mxu0
    %2248 = vdwg.mxu0
    %v2249 = vmax.f32 %v2246, 0.0
    %v2250 = vlaneseq
    %v2251 = vshrl.u32 %v2250, 7
    %v2252 = vsub.s32 0, %v2251
    %v2253 = vrot.slane %v43, %v2252
    %vm2254 = vcmask 687104
    %v2256 = vsel %vm2254, %v2249, 0
    %vm2258 = vcmask 1043456
    %v2260 = vsel %vm2258, %v42, 0
    %2262 = vmatprep.subr.mxu0 0.0
    %2263 = vmatpush1.msra.mxu0 %v32
    %2264 = vmatprep.subr.mxu0 0.0
    %2265 = vmatpush1.msra.mxu0 %v33
    %2266 = vmatprep.subr.mxu0 0.0
    %2267 = vmatpush1.msra.mxu0 %v34
    %2268 = vmatprep.subr.mxu0 0.0
    %2269 = vmatpush1.msra.mxu0 %v35
    %2270 = vmatprep.subr.mxu0 0.0
    %2271 = vmatpush1.msra.mxu0 %v36
    %2272 = vmatprep.subr.mxu0 0.0
    %2273 = vmatpush1.msra.mxu0 %v37
    %2274 = vmatprep.subr.mxu0 0.0
    %2275 = vmatpush1.msra.mxu0 %v38
    %2276 = vmatprep.subr.mxu0 0.0
    %2277 = vmatpush1.msra.mxu0 %v39
    %2278 = vmatprep.subr.mxu0 0.0
    %2279 = vmatpush1.msra.mxu0 %v40
    %2280 = vmatprep.subr.mxu0 0.0
    %2281 = vmatpush1.msra.mxu0 %v41
    %2282 = vmatprep.subr.mxu0 0.0
    %2283 = vmatpush1.msra.mxu0 %v2260
    %2284 = vmatprep.subr.mxu0 0.0
    %2285 = vmatpush1.msra.mxu0 0.0
    %2286 = vmatprep.subr.mxu0 0.0
    %2287 = vmatpush1.msra.mxu0 0.0
    %2288 = vmatprep.subr.mxu0 0.0
    %2289 = vmatpush1.msra.mxu0 0.0
    %2290 = vmatprep.subr.mxu0 0.0
    %2291 = vmatpush1.msra.mxu0 0.0
    %2292 = vmatprep.subr.mxu0 0.0
    %2293 = vmatpush1.msra.mxu0 0.0
    %2294 = vmatprep.subr.mxu0 0.0
    %2295 = vmatpush1.msra.mxu0 0.0
    %2296 = vmatprep.subr.mxu0 0.0
    %2297 = vmatpush1.msra.mxu0 0.0
    %2298 = vmatprep.subr.mxu0 0.0
    %2299 = vmatpush1.msra.mxu0 0.0
    %2300 = vmatprep.subr.mxu0 0.0
    %2301 = vmatpush1.msra.mxu0 0.0
    %2302 = vmatprep.subr.mxu0 0.0
    %2303 = vmatpush1.msra.mxu0 0.0
    %2304 = vmatprep.subr.mxu0 0.0
    %2305 = vmatpush1.msra.mxu0 0.0
    %2306 = vmatprep.subr.mxu0 0.0
    %2307 = vmatpush1.msra.mxu0 0.0
    %2308 = vmatprep.subr.mxu0 0.0
    %2309 = vmatpush1.msra.mxu0 0.0
    %2310 = vmatprep.subr.mxu0 0.0
    %2311 = vmatpush1.msra.mxu0 0.0
    %2312 = vmatprep.subr.mxu0 0.0
    %2313 = vmatpush1.msra.mxu0 0.0
    %2314 = vmatprep.subr.mxu0 0.0
    %2315 = vmatpush1.msra.mxu0 0.0
    %2316 = vmatprep.subr.mxu0 0.0
    %2317 = vmatpush1.msra.mxu0 0.0
    %2318 = vmatprep.subr.mxu0 0.0
    %2319 = vmatpush1.msra.mxu0 0.0
    %2320 = vmatprep.subr.mxu0 0.0
    %2321 = vmatpush1.msra.mxu0 0.0
    %2322 = vmatprep.subr.mxu0 0.0
    %2323 = vmatpush1.msra.mxu0 0.0
    %2324 = vmatprep.subr.mxu0 0.0
    %2325 = vmatpush1.msra.mxu0 0.0
    %2326 = vmatprep.mubr.f32.mxu0 0.0
    %2327 = vmatmul.mubr.f32.gmra.mrb[0].mxu0 %v2256
    %v2328 = vpop.f32.mrb[0].mxu0
    %v2329 = vadd.f32 %v2253, %v2328
    %v2330 = vpop.f32.mrb[0].mxu0
    %2331 = vdwg.mxu0
    %v2332 = vmax.f32 %v2329, 0.0
    %v2333 = vlaneseq
    %v2334 = vshrl.u32 %v2333, 7
    %v2335 = vsub.s32 0, %v2334
    %v2336 = vrot.slane %v46, %v2335
    %vm2337 = vcmask 113664
    %v2339 = vsel %vm2337, %v2332, 0
    %vm2341 = vcmask 1045504
    %v2343 = vsel %vm2341, %v45, 0
    %2345 = vmatprep.subr.mxu0 0.0
    %2346 = vmatpush1.msra.mxu0 %v44
    %2347 = vmatprep.subr.mxu0 0.0
    %2348 = vmatpush1.msra.mxu0 %v2343
    %2349 = vmatprep.subr.mxu0 0.0
    %2350 = vmatpush1.msra.mxu0 0.0
    %2351 = vmatprep.subr.mxu0 0.0
    %2352 = vmatpush1.msra.mxu0 0.0
    %2353 = vmatprep.subr.mxu0 0.0
    %2354 = vmatpush1.msra.mxu0 0.0
    %2355 = vmatprep.subr.mxu0 0.0
    %2356 = vmatpush1.msra.mxu0 0.0
    %2357 = vmatprep.subr.mxu0 0.0
    %2358 = vmatpush1.msra.mxu0 0.0
    %2359 = vmatprep.subr.mxu0 0.0
    %2360 = vmatpush1.msra.mxu0 0.0
    %2361 = vmatprep.subr.mxu0 0.0
    %2362 = vmatpush1.msra.mxu0 0.0
    %2363 = vmatprep.subr.mxu0 0.0
    %2364 = vmatpush1.msra.mxu0 0.0
    %2365 = vmatprep.subr.mxu0 0.0
    %2366 = vmatpush1.msra.mxu0 0.0
    %2367 = vmatprep.subr.mxu0 0.0
    %2368 = vmatpush1.msra.mxu0 0.0
    %2369 = vmatprep.subr.mxu0 0.0
    %2370 = vmatpush1.msra.mxu0 0.0
    %2371 = vmatprep.subr.mxu0 0.0
    %2372 = vmatpush1.msra.mxu0 0.0
    %2373 = vmatprep.subr.mxu0 0.0
    %2374 = vmatpush1.msra.mxu0 0.0
    %2375 = vmatprep.subr.mxu0 0.0
    %2376 = vmatpush1.msra.mxu0 0.0
    %2377 = vmatprep.subr.mxu0 0.0
    %2378 = vmatpush1.msra.mxu0 0.0
    %2379 = vmatprep.subr.mxu0 0.0
    %2380 = vmatpush1.msra.mxu0 0.0
    %2381 = vmatprep.subr.mxu0 0.0
    %2382 = vmatpush1.msra.mxu0 0.0
    %2383 = vmatprep.subr.mxu0 0.0
    %2384 = vmatpush1.msra.mxu0 0.0
    %2385 = vmatprep.subr.mxu0 0.0
    %2386 = vmatpush1.msra.mxu0 0.0
    %2387 = vmatprep.subr.mxu0 0.0
    %2388 = vmatpush1.msra.mxu0 0.0
    %2389 = vmatprep.subr.mxu0 0.0
    %2390 = vmatpush1.msra.mxu0 0.0
    %2391 = vmatprep.subr.mxu0 0.0
    %2392 = vmatpush1.msra.mxu0 0.0
    %2393 = vmatprep.subr.mxu0 0.0
    %2394 = vmatpush1.msra.mxu0 0.0
    %2395 = vmatprep.subr.mxu0 0.0
    %2396 = vmatpush1.msra.mxu0 0.0
    %2397 = vmatprep.subr.mxu0 0.0
    %2398 = vmatpush1.msra.mxu0 0.0
    %2399 = vmatprep.subr.mxu0 0.0
    %2400 = vmatpush1.msra.mxu0 0.0
    %2401 = vmatprep.subr.mxu0 0.0
    %2402 = vmatpush1.msra.mxu0 0.0
    %2403 = vmatprep.subr.mxu0 0.0
    %2404 = vmatpush1.msra.mxu0 0.0
    %2405 = vmatprep.subr.mxu0 0.0
    %2406 = vmatpush1.msra.mxu0 0.0
    %2407 = vmatprep.subr.mxu0 0.0
    %2408 = vmatpush1.msra.mxu0 0.0
    %2409 = vmatprep.mubr.f32.mxu0 0.0
    %2410 = vmatmul.mubr.f32.gmra.mrb[0].mxu0 %v2339
    %v2411 = vpop.f32.mrb[0].mxu0
    %v2412 = vadd.f32 %v2336, %v2411
    %v2413 = vpop.f32.mrb[0].mxu0
    %2414 = vdwg.mxu0
    %vm2415 = vcmask 66560
    %2416 = vst.msk [vmem:[#allocation4] sm:$0x3] %vm2415, %v2412
    // Predicated region
    $region10: #{net_forward.1} parent=1 // pred_check
      _
    $region11: #{net_forward.1} parent=1 // pred_check_branch
      %2418 = sbr.rel (0) target = $region13
    $region12: #{net_forward.1} parent=1 // pred_region
      %s2420 = ssub.s32 32, 32
      %2421 = vsyncadd [#allocation5], %s2420
      %s2423 = sshll.u32 [#allocation4], 4
      %s2424 = int_to_ptr.vmem [resolvable:$true] %s2423
      %2426 = dma.vmem_to_hbm [thread:$0]  %s2424, 32, %s2, [#allocation5]
    $region13: #{net_forward.1} parent=1 // pred_fallthru
      _
    // Predicated region
    $region14: #{net_forward.1} parent=1 // pred_check
      _
    $region15: #{net_forward.1} parent=1 // pred_check_branch
      %2428 = sbr.rel (0) target = $region17
    $region16: #{net_forward.1} parent=1 // pred_region
      %2429 = dma.done [#allocation5], 32
    $region17: #{net_forward.1} parent=1 // pred_fallthru
      _
    %2430 = vsyncpa [#allocation5], 1

</llo_original>
